<compile_context>
chip_gen: v6e
topology: v6e:2x2x1
jax: 0.10.0
libtpu: 0.0.40
codegen_flags: <defaults>
</compile_context>

<pallas_src>
import numpy as np
import jax
import jax.numpy as jnp
from jax.experimental import pallas as pl
from jax.experimental.pallas import tpu as pltpu

_HIDDEN = 512  # to_unsquashed_temperature.dense_1 width (fixed by the module)


def _round_up(x, m):
    return ((x + m - 1) // m) * m


def _cdiv(a, b):
    return -(-a // b)


def _vmem_budget():
    """Returns (vmem_limit_bytes for CompilerParams, tile-sizing budget)."""
    try:
        cap = int(pltpu.get_tpu_info().vmem_capacity_bytes)
    except Exception:
        cap = 64 * 2**20                      # conservative: v7x per-TC VMEM
    vmem_limit = int(min(0.8 * cap, 100 * 2**20))   # ~51 MiB v7x / ~100 MiB v5e,v6e
    budget = int(0.85 * vmem_limit)                 # headroom for compiler scratch
    return vmem_limit, budget


def _make_kernel(weights_resident, tk):
    """Kernel factory; `weights_resident` / `tk` are trace-time constants."""

    def kernel(x_ref, n_ref, wc_ref, bc_ref, w1_ref, b1_ref, w2_ref, b2_ref,
               out_ref, logits_acc, h_acc):
        k = pl.program_id(1)

        @pl.when(k == 0)
        def _init():
            logits_acc[...] = jnp.zeros_like(logits_acc)
            h_acc[...] = jnp.zeros_like(h_acc)

        # Activations may arrive as f32 (no-pad path) or bf16 (padded path);
        # cast right before the MXU so HBM only ever sees the cheaper format.
        x_t = x_ref[...].astype(jnp.bfloat16)
        n_t = n_ref[...].astype(jnp.bfloat16)

        if weights_resident:
            # Full padded weights live in VMEM for the whole grid; slice the
            # current K window (aligned: tk is a multiple of 128).
            off = pl.multiple_of(k * tk, tk)
            wc_t = wc_ref[pl.ds(off, tk), :]
            w1_t = w1_ref[pl.ds(off, tk), :]
        else:
            wc_t = wc_ref[...]
            w1_t = w1_ref[...]

        # Both contractions share the same K loop; f32 accumulation in VMEM.
        logits_acc[...] += jnp.dot(x_t, wc_t, preferred_element_type=jnp.float32)
        h_acc[...] += jnp.dot(n_t, w1_t, preferred_element_type=jnp.float32)

        @pl.when(k == pl.num_programs(1) - 1)
        def _finalize():
            logits = logits_acc[...] + bc_ref[...]
            h = jnp.maximum(h_acc[...] + b1_ref[...], 0.0)            # ReLU
            # dense_2 (512 -> 1) as VPU multiply + lane reduction (an N=1 MXU
            # matmul would waste 127/128 lanes and pay a weight push).
            u = jnp.sum(h * w2_ref[...], axis=-1, keepdims=True) + b2_ref[...]
            # numerically stable softplus: log1p(exp(-|u|)) + max(u, 0)
            sp = jnp.log1p(jnp.exp(-jnp.abs(u))) + jnp.maximum(u, 0.0)
            inv_t = 1.0 / (1.0 + sp)           # exact; (tm,1), off the K path
            out_ref[...] = logits * inv_t

    return kernel


def prepare_params(params, *, tk_max=2048):
    """Pad + cast the static weights ONCE (not per forward call) and pick the
    feature-axis tiling.  Returns a dict consumed by calibrated_forward."""
    wc, bc = params["wc"], params["bc"]
    w1, b1 = params["w1"], params["b1"]
    w2, b2 = params["w2"], params["b2"]
    D, n_classes = int(wc.shape[0]), int(wc.shape[1])
    Hn = int(w1.shape[1])

    vmem_limit, budget = _vmem_budget()

    # lane-dense class dim; use 256-wide tiles once it exceeds one MXU tile
    Cp = _round_up(n_classes, 128) if n_classes <= 128 else _round_up(n_classes, 256)

    # Weight residency: full padded wc/w1 stay in VMEM for the whole grid
    # (constant index_map => fetched once, never re-streamed per batch tile).
    # Factor 2 accounts for the default double-buffer allocation.
    D_r128 = _round_up(D, 128)
    resident = (2 * D_r128 * (Cp + Hn) * 2) <= int(0.45 * budget)

    # feature (reduction) tiling with minimal padding waste
    k_tiles = _cdiv(D_r128, tk_max)
    tk = _round_up(_cdiv(D, k_tiles), 128)
    D_pad = k_tiles * tk

    bf16, f32 = jnp.bfloat16, jnp.float32
    wc_p = jnp.zeros((D_pad, Cp), bf16).at[:D, :n_classes].set(jnp.asarray(wc, bf16))
    w1_p = jnp.zeros((D_pad, Hn), bf16).at[:D, :].set(jnp.asarray(w1, bf16))
    bc_p = jnp.zeros((1, Cp), f32).at[:, :n_classes].set(
        jnp.asarray(bc, f32).reshape(1, n_classes))
    b1_p = jnp.asarray(b1, f32).reshape(1, Hn)
    w2_row = jnp.asarray(w2, f32).reshape(1, Hn)      # (512, 1) -> (1, 512)
    b2_p = jnp.asarray(b2, f32).reshape(1, 1)

    return dict(
        wc=wc_p, bc=bc_p, w1=w1_p, b1=b1_p, w2=w2_row, b2=b2_p,
        plan=dict(D=D, n_classes=n_classes, Hn=Hn, Cp=Cp, tk=tk,
                  k_tiles=k_tiles, D_pad=D_pad, resident=resident,
                  vmem_limit=vmem_limit, budget=budget),
    )


def calibrated_forward(x, noise, prepared, *, tm_max=1024):
    """x, noise: (B, C, H, W) float32.  Returns calibrated logits (B, n_classes)."""
    plan = prepared["plan"]
    D, n_classes, Hn = plan["D"], plan["n_classes"], plan["Hn"]
    Cp, tk, k_tiles, D_pad = plan["Cp"], plan["tk"], plan["k_tiles"], plan["D_pad"]
    resident = plan["resident"]
    budget = plan["budget"]

    B = int(x.shape[0])
    assert int(np.prod(x.shape[1:])) == D
    x_flat = x.reshape(B, D)            # matches torch.flatten(start_dim=1)
    n_flat = noise.reshape(B, D)

    # ---- batch tiling: biggest tm the VMEM budget allows, minimal padding ----
    per_tm = 4 * tk * 4 + 2 * Cp * 4 + (Cp + Hn) * 4       # per-row bytes (f32 worst case)
    fixed = (2 * D_pad * (Cp + Hn) * 2) if resident else (4 * tk * (Cp + Hn))
    tm_cap = min(tm_max, (budget - fixed) // per_tm)
    tm_cap = max(16, (tm_cap // 16) * 16)
    B16 = _round_up(B, 16)
    n_b = _cdiv(B16, tm_cap)
    tm = _round_up(_cdiv(B, n_b), 16)
    if n_b == 1 and B >= 32:            # v7x megacore: parallel axis extent >= 2
        n_b = 2
        tm = _round_up(_cdiv(B, 2), 16)
    B_pad = n_b * tm

    bf16, f32 = jnp.bfloat16, jnp.float32
    need_pad = (B_pad != B) or (D_pad != D)
    if need_pad:
        # padded copy unavoidable; make it bf16 so the extra pass halves traffic
        x_in = jnp.zeros((B_pad, D_pad), bf16).at[:B, :D].set(x_flat.astype(bf16))
        n_in = jnp.zeros((B_pad, D_pad), bf16).at[:B, :D].set(n_flat.astype(bf16))
    else:
        # no wrapper-side copy: stream f32 straight from HBM, cast in-kernel
        x_in, n_in = x_flat, n_flat

    if resident:
        wc_spec = pl.BlockSpec((D_pad, Cp), lambda i, k: (0, 0))
        w1_spec = pl.BlockSpec((D_pad, Hn), lambda i, k: (0, 0))
    else:
        wc_spec = pl.BlockSpec((tk, Cp), lambda i, k: (k, 0))
        w1_spec = pl.BlockSpec((tk, Hn), lambda i, k: (k, 0))

    act_bytes = int(jnp.dtype(x_in.dtype).itemsize)
    w_passes = 1 if resident else n_b
    cost = pl.CostEstimate(
        flops=int(2 * B_pad * D_pad * (Cp + Hn) + 4 * B_pad * Hn),
        transcendentals=int(2 * B_pad),
        bytes_accessed=int(2 * B_pad * D_pad * act_bytes
                           + w_passes * D_pad * (Cp + Hn) * 2
                           + B_pad * Cp * 4),
    )

    out = pl.pallas_call(
        _make_kernel(resident, tk),
        out_shape=jax.ShapeDtypeStruct((B_pad, Cp), f32),
        grid_spec=pltpu.PrefetchScalarGridSpec(
            num_scalar_prefetch=0,
            grid=(n_b, k_tiles),
            in_specs=[
                pl.BlockSpec((tm, tk), lambda i, k: (i, k)),    # x tile
                pl.BlockSpec((tm, tk), lambda i, k: (i, k)),    # noise tile
                wc_spec,                                        # classifier weight
                pl.BlockSpec((1, Cp), lambda i, k: (0, 0)),     # classifier bias
                w1_spec,                                        # dense_1 weight
                pl.BlockSpec((1, Hn), lambda i, k: (0, 0)),     # dense_1 bias
                pl.BlockSpec((1, Hn), lambda i, k: (0, 0)),     # dense_2 weight row
                pl.BlockSpec((1, 1), lambda i, k: (0, 0)),      # dense_2 bias
            ],
            out_specs=pl.BlockSpec((tm, Cp), lambda i, k: (i, 0)),
            scratch_shapes=[
                pltpu.VMEM((tm, Cp), f32),                      # logits accumulator
                pltpu.VMEM((tm, Hn), f32),                      # hidden accumulator
            ],
        ),
        compiler_params=pltpu.CompilerParams(
            dimension_semantics=("parallel", "arbitrary"),
            vmem_limit_bytes=int(plan["vmem_limit"]),
        ),
        cost_estimate=cost,
    )(x_in, n_in, prepared["wc"], prepared["bc"], prepared["w1"],
      prepared["b1"], prepared["w2"], prepared["b2"])

    return out[:B, :n_classes]


def make_params(key, input_shape, n_classes, hidden=_HIDDEN):
    """Deterministic synthetic parameters matching the PyTorch __init__ shapes."""
    D = int(np.prod(input_shape))
    k1, k2, k3, k4 = jax.random.split(key, 4)
    # synthetic classifier: Linear(D, n_classes)
    wc = jax.random.normal(k1, (D, n_classes), jnp.float32) * 0.02
    bc = jax.random.normal(k2, (1, n_classes), jnp.float32) * 0.02
    # to_unsquashed_temperature.dense_1: Linear(D, 512)
    w1 = jax.random.uniform(k3, (D, hidden), jnp.float32,
                            minval=-1.0, maxval=1.0) / np.sqrt(D)
    b1 = jax.random.uniform(k4, (1, hidden), jnp.float32, minval=-0.03, maxval=0.03)
    # dense_2: weight = 0, bias = log(e - 1)  (exactly as nn.init.constant_)
    w2 = jnp.zeros((hidden, 1), jnp.float32)
    b2 = jnp.full((1, 1), np.log(np.exp(1.0) - 1.0), jnp.float32)
    return dict(wc=wc, bc=bc, w1=w1, b1=b1, w2=w2, b2=b2)


def _reference(x, noise, params):
    B = x.shape[0]
    D = int(np.prod(x.shape[1:]))
    xf, nf = x.reshape(B, D), noise.reshape(B, D)
    logits = xf @ params["wc"] + params["bc"]
    h = jnp.maximum(nf @ params["w1"] + params["b1"], 0.0)
    u = h @ params["w2"] + params["b2"]
    temp = 1.0 + jax.nn.softplus(u)
    return logits / temp


if __name__ == "__main__":
    # small shapes consistent with the module: input_shape=(4,16,16), 10 classes
    B, C, H, W = 8, 4, 16, 16
    n_classes = 10

    key = jax.random.PRNGKey(0)
    kx, kn, kp, kw = jax.random.split(key, 4)
    x = jax.random.normal(kx, (B, C, H, W), jnp.float32)
    noise = jax.random.normal(kn, (B, C, H, W), jnp.float32)

    # 1) module-faithful init (dense_2 weight = 0, bias = log(e-1))
    params = make_params(kp, (C, H, W), n_classes)
    prepared = prepare_params(params)
    out = jax.block_until_ready(calibrated_forward(x, noise, prepared))
    ref = _reference(x, noise, params)
    # bf16 streamed operands => loosened f32 tolerance
    np.testing.assert_allclose(np.asarray(out), np.asarray(ref), rtol=3e-2, atol=3e-2)

    # 2) nonzero dense_2 weights — exercise the temperature-MLP reduction path
    params2 = dict(params)
    params2["w2"] = jax.random.normal(kw, (_HIDDEN, 1), jnp.float32) * 0.05
    params2["b2"] = jnp.full((1, 1), 0.1, jnp.float32)
    prepared2 = prepare_params(params2)
    out2 = jax.block_until_ready(calibrated_forward(x, noise, prepared2))
    ref2 = _reference(x, noise, params2)
    np.testing.assert_allclose(np.asarray(out2), np.asarray(ref2), rtol=3e-2, atol=3e-2)

    print("KERNEL_OK")
</pallas_src>

<mosaic_0001>
module attributes {stable_mosaic.version = 11 : i64} {
  func.func @kernel(%arg0: i32, %arg1: i32, %arg2: memref<16x1024xbf16, #tpu.memory_space<vmem>>, %arg3: memref<16x1024xbf16, #tpu.memory_space<vmem>>, %arg4: memref<1024x128xbf16, #tpu.memory_space<vmem>>, %arg5: memref<1x128xf32, #tpu.memory_space<vmem>>, %arg6: memref<1024x512xbf16, #tpu.memory_space<vmem>>, %arg7: memref<1x512xf32, #tpu.memory_space<vmem>>, %arg8: memref<1x512xf32, #tpu.memory_space<vmem>>, %arg9: memref<1x1xf32, #tpu.memory_space<vmem>>, %arg10: memref<16x128xf32, #tpu.memory_space<vmem>>, %arg11: memref<16x128xf32, #tpu.memory_space<vmem>>, %arg12: memref<16x512xf32, #tpu.memory_space<vmem>>) attributes {dimension_semantics = [#tpu.dimension_semantics<parallel>, #tpu.dimension_semantics<arbitrary>], iteration_bounds = array<i64: 1, 1>, scalar_prefetch = 0 : i64, scratch_operands = 2 : i64, tpu.core_type = #tpu.core_type<tc>, window_params = [{transform_indices = @transform_0, window_bounds = array<i64: 16, 1024>}, {transform_indices = @transform_1, window_bounds = array<i64: 16, 1024>}, {pipeline_mode = #tpu.pipeline_mode<synchronous>, transform_indices = @transform_2, window_bounds = array<i64: 1024, 128>}, {pipeline_mode = #tpu.pipeline_mode<synchronous>, transform_indices = @transform_3, window_bounds = array<i64: 1, 128>}, {pipeline_mode = #tpu.pipeline_mode<synchronous>, transform_indices = @transform_4, window_bounds = array<i64: 1024, 512>}, {pipeline_mode = #tpu.pipeline_mode<synchronous>, transform_indices = @transform_5, window_bounds = array<i64: 1, 512>}, {pipeline_mode = #tpu.pipeline_mode<synchronous>, transform_indices = @transform_6, window_bounds = array<i64: 1, 512>}, {pipeline_mode = #tpu.pipeline_mode<synchronous>, transform_indices = @transform_7, window_bounds = array<i64: 1, 1>}, {transform_indices = @transform_8, window_bounds = array<i64: 16, 128>}]} {
    %c0_i32 = arith.constant 0 : i32
    %0 = arith.cmpi eq, %arg1, %c0_i32 : i32
    %1 = arith.extui %0 : i1 to i32
    %c0_i32_0 = arith.constant 0 : i32
    %2 = arith.cmpi ne, %1, %c0_i32_0 : i32
    scf.if %2 {
      %cst_17 = arith.constant 0.000000e+00 : f32
      %22 = vector.broadcast %cst_17 : f32 to vector<16x128xf32>
      %c0_18 = arith.constant 0 : index
      %c0_19 = arith.constant 0 : index
      %23 = vector.load %arg11[%c0_18, %c0_19] : memref<16x128xf32, #tpu.memory_space<vmem>>, vector<16x128xf32>
      tpu.vector_store %arg11[%c0_18, %c0_19], %22 {strides = array<i32>} : memref<16x128xf32, #tpu.memory_space<vmem>>, vector<16x128xf32>,
      %cst_20 = arith.constant 0.000000e+00 : f32
      %24 = vector.broadcast %cst_20 : f32 to vector<16x512xf32>
      %c0_21 = arith.constant 0 : index
      %c0_22 = arith.constant 0 : index
      %25 = vector.load %arg12[%c0_21, %c0_22] : memref<16x512xf32, #tpu.memory_space<vmem>>, vector<16x512xf32>
      tpu.vector_store %arg12[%c0_21, %c0_22], %24 {strides = array<i32>} : memref<16x512xf32, #tpu.memory_space<vmem>>, vector<16x512xf32>,
    } else {
    }
    %c0 = arith.constant 0 : index
    %c0_1 = arith.constant 0 : index
    %3 = vector.load %arg2[%c0, %c0_1] : memref<16x1024xbf16, #tpu.memory_space<vmem>>, vector<16x1024xbf16>
    %c0_2 = arith.constant 0 : index
    %c0_3 = arith.constant 0 : index
    %4 = vector.load %arg3[%c0_2, %c0_3] : memref<16x1024xbf16, #tpu.memory_space<vmem>>, vector<16x1024xbf16>
    %c1024_i32 = arith.constant 1024 : i32
    %5 = arith.muli %arg1, %c1024_i32 : i32
    %6 = tpu.assume_multiple %5, 1024 : i32
    %7 = arith.index_cast %6 : i32 to index
    %c0_4 = arith.constant 0 : index
    %8 = vector.load %arg4[%7, %c0_4] : memref<1024x128xbf16, #tpu.memory_space<vmem>>, vector<1024x128xbf16>
    %9 = arith.index_cast %6 : i32 to index
    %c0_5 = arith.constant 0 : index
    %10 = vector.load %arg6[%9, %c0_5] : memref<1024x512xbf16, #tpu.memory_space<vmem>>, vector<1024x512xbf16>
    %c0_6 = arith.constant 0 : index
    %c0_7 = arith.constant 0 : index
    %11 = vector.load %arg11[%c0_6, %c0_7] : memref<16x128xf32, #tpu.memory_space<vmem>>, vector<16x128xf32>
    %cst = arith.constant dense<0.000000e+00> : vector<16x128xf32>
    %12 = tpu.matmul %3, %8, %cst {dimension_numbers = #tpu.dot_dimension_numbers<[1], [0], [0], [1], [0, 0, 1, 1], [], []>} : vector<16x1024xbf16>, vector<1024x128xbf16>, vector<16x128xf32> -> vector<16x128xf32>
    %13 = arith.addf %11, %12 : vector<16x128xf32>
    %c0_8 = arith.constant 0 : index
    %c0_9 = arith.constant 0 : index
    %14 = vector.load %arg11[%c0_8, %c0_9] : memref<16x128xf32, #tpu.memory_space<vmem>>, vector<16x128xf32>
    tpu.vector_store %arg11[%c0_8, %c0_9], %13 {strides = array<i32>} : memref<16x128xf32, #tpu.memory_space<vmem>>, vector<16x128xf32>,
    %c0_10 = arith.constant 0 : index
    %c0_11 = arith.constant 0 : index
    %15 = vector.load %arg12[%c0_10, %c0_11] : memref<16x512xf32, #tpu.memory_space<vmem>>, vector<16x512xf32>
    %cst_12 = arith.constant dense<0.000000e+00> : vector<16x512xf32>
    %16 = tpu.matmul %4, %10, %cst_12 {dimension_numbers = #tpu.dot_dimension_numbers<[1], [0], [0], [1], [0, 0, 1, 1], [], []>} : vector<16x1024xbf16>, vector<1024x512xbf16>, vector<16x512xf32> -> vector<16x512xf32>
    %17 = arith.addf %15, %16 : vector<16x512xf32>
    %c0_13 = arith.constant 0 : index
    %c0_14 = arith.constant 0 : index
    %18 = vector.load %arg12[%c0_13, %c0_14] : memref<16x512xf32, #tpu.memory_space<vmem>>, vector<16x512xf32>
    tpu.vector_store %arg12[%c0_13, %c0_14], %17 {strides = array<i32>} : memref<16x512xf32, #tpu.memory_space<vmem>>, vector<16x512xf32>,
    %c0_i32_15 = arith.constant 0 : i32
    %19 = arith.cmpi eq, %arg1, %c0_i32_15 : i32
    %20 = arith.extui %19 : i1 to i32
    %c0_i32_16 = arith.constant 0 : i32
    %21 = arith.cmpi ne, %20, %c0_i32_16 : i32
    scf.if %21 {
      %c0_17 = arith.constant 0 : index
      %c0_18 = arith.constant 0 : index
      %22 = vector.load %arg11[%c0_17, %c0_18] : memref<16x128xf32, #tpu.memory_space<vmem>>, vector<16x128xf32>
      %c0_19 = arith.constant 0 : index
      %c0_20 = arith.constant 0 : index
      %23 = vector.load %arg5[%c0_19, %c0_20] : memref<1x128xf32, #tpu.memory_space<vmem>>, vector<1x128xf32>
      %24 = vector.broadcast %23 : vector<1x128xf32> to vector<16x128xf32>
      %25 = arith.addf %22, %24 : vector<16x128xf32>
      %c0_21 = arith.constant 0 : index
      %c0_22 = arith.constant 0 : index
      %26 = vector.load %arg12[%c0_21, %c0_22] : memref<16x512xf32, #tpu.memory_space<vmem>>, vector<16x512xf32>
      %c0_23 = arith.constant 0 : index
      %c0_24 = arith.constant 0 : index
      %27 = vector.load %arg7[%c0_23, %c0_24] : memref<1x512xf32, #tpu.memory_space<vmem>>, vector<1x512xf32>
      %28 = vector.broadcast %27 : vector<1x512xf32> to vector<16x512xf32>
      %29 = arith.addf %26, %28 : vector<16x512xf32>
      %cst_25 = arith.constant 0.000000e+00 : f32
      %30 = vector.broadcast %cst_25 : f32 to vector<16x512xf32>
      %31 = arith.maximumf %29, %30 : vector<16x512xf32>
      %c0_26 = arith.constant 0 : index
      %c0_27 = arith.constant 0 : index
      %32 = vector.load %arg8[%c0_26, %c0_27] : memref<1x512xf32, #tpu.memory_space<vmem>>, vector<1x512xf32>
      %33 = vector.broadcast %32 : vector<1x512xf32> to vector<16x512xf32>
      %34 = arith.mulf %31, %33 : vector<16x512xf32>
      %cst_28 = arith.constant dense<0.000000e+00> : vector<16xf32>
      %35 = vector.multi_reduction <add>, %34, %cst_28 [1] : vector<16x512xf32> to vector<16xf32>
      %36 = vector.shape_cast %35 : vector<16xf32> to vector<16x1xf32>
      %c0_29 = arith.constant 0 : index
      %c0_30 = arith.constant 0 : index
      %37 = vector.load %arg9[%c0_29, %c0_30] : memref<1x1xf32, #tpu.memory_space<vmem>>, vector<1x1xf32>
      %38 = vector.broadcast %37 : vector<1x1xf32> to vector<16x1xf32>
      %39 = arith.addf %36, %38 : vector<16x1xf32>
      %40 = math.absf %39 : vector<16x1xf32>
      %cst_31 = arith.constant 0.000000e+00 : f32
      %41 = vector.broadcast %cst_31 : f32 to vector<16x1xf32>
      %42 = arith.subf %41, %40 : vector<16x1xf32>
      %43 = math.exp %42 : vector<16x1xf32>
      %44 = math.log1p %43 : vector<16x1xf32>
      %cst_32 = arith.constant 0.000000e+00 : f32
      %45 = vector.broadcast %cst_32 : f32 to vector<16x1xf32>
      %46 = arith.maximumf %39, %45 : vector<16x1xf32>
      %47 = arith.addf %44, %46 : vector<16x1xf32>
      %cst_33 = arith.constant 1.000000e+00 : f32
      %48 = vector.broadcast %cst_33 : f32 to vector<16x1xf32>
      %49 = arith.addf %48, %47 : vector<16x1xf32>
      %cst_34 = arith.constant 1.000000e+00 : f32
      %50 = vector.broadcast %cst_34 : f32 to vector<16x1xf32>
      %51 = arith.divf %50, %49 : vector<16x1xf32>
      %52 = vector.broadcast %51 : vector<16x1xf32> to vector<16x128xf32>
      %53 = arith.mulf %25, %52 : vector<16x128xf32>
      %c0_35 = arith.constant 0 : index
      %c0_36 = arith.constant 0 : index
      %54 = vector.load %arg10[%c0_35, %c0_36] : memref<16x128xf32, #tpu.memory_space<vmem>>, vector<16x128xf32>
      tpu.vector_store %arg10[%c0_35, %c0_36], %53 {strides = array<i32>} : memref<16x128xf32, #tpu.memory_space<vmem>>, vector<16x128xf32>,
    } else {
    }
    return
  }
  func.func @transform_0(%arg0: i32, %arg1: i32) -> (i32, i32) {
    %c0_i32 = arith.constant 0 : i32
    return %arg0, %arg1 : i32, i32
  }
  func.func @transform_1(%arg0: i32, %arg1: i32) -> (i32, i32) {
    %c0_i32 = arith.constant 0 : i32
    return %arg0, %arg1 : i32, i32
  }
  func.func @transform_2(%arg0: i32, %arg1: i32) -> (i32, i32) {
    %c0_i32 = arith.constant 0 : i32
    %c0_i32_0 = arith.constant 0 : i32
    %c0_i32_1 = arith.constant 0 : i32
    return %c0_i32, %c0_i32_0 : i32, i32
  }
  func.func @transform_3(%arg0: i32, %arg1: i32) -> (i32, i32) {
    %c0_i32 = arith.constant 0 : i32
    %c0_i32_0 = arith.constant 0 : i32
    %c0_i32_1 = arith.constant 0 : i32
    return %c0_i32, %c0_i32_0 : i32, i32
  }
  func.func @transform_4(%arg0: i32, %arg1: i32) -> (i32, i32) {
    %c0_i32 = arith.constant 0 : i32
    %c0_i32_0 = arith.constant 0 : i32
    %c0_i32_1 = arith.constant 0 : i32
    return %c0_i32, %c0_i32_0 : i32, i32
  }
  func.func @transform_5(%arg0: i32, %arg1: i32) -> (i32, i32) {
    %c0_i32 = arith.constant 0 : i32
    %c0_i32_0 = arith.constant 0 : i32
    %c0_i32_1 = arith.constant 0 : i32
    return %c0_i32, %c0_i32_0 : i32, i32
  }
  func.func @transform_6(%arg0: i32, %arg1: i32) -> (i32, i32) {
    %c0_i32 = arith.constant 0 : i32
    %c0_i32_0 = arith.constant 0 : i32
    %c0_i32_1 = arith.constant 0 : i32
    return %c0_i32, %c0_i32_0 : i32, i32
  }
  func.func @transform_7(%arg0: i32, %arg1: i32) -> (i32, i32) {
    %c0_i32 = arith.constant 0 : i32
    %c0_i32_0 = arith.constant 0 : i32
    %c0_i32_1 = arith.constant 0 : i32
    return %c0_i32, %c0_i32_0 : i32, i32
  }
  func.func @transform_8(%arg0: i32, %arg1: i32) -> (i32, i32) {
    %c0_i32 = arith.constant 0 : i32
    %c0_i32_0 = arith.constant 0 : i32
    return %arg0, %c0_i32 : i32, i32
  }
}

</mosaic_0001>

<llo_original>
// kernel: tpu_custom_call.1
$region0: #{tpu_custom_call.1}
  #allocation0 [shape = 'u32[]', space=smem, size = 0x4, offset = 0x4, fixed_abs, tag = 'smem constant byte address 0x4 - core index']
  #allocation1 [shape = 'u32[144,128]{1,0:T(1,128)}', space=vmem, size = 0x12000, scoped, tag = 'internal scratch']
  #allocation2 [shape = 'f32[16,128]{1,0:T(8,128)}', space=vmem, size = 0x2000, scoped, tag = 'scratch operand']
  #allocation3 [shape = 'f32[16,512]{1,0:T(8,128)}', space=vmem, size = 0x8000, scoped, tag = 'scratch operand']
  #allocation4 [shape = 'f32[1,1]{1,0:T(1,128)S(1)}', space=vmem, size = 0x200, scoped, tag = 'scoped memory for tpu_custom_call.1']
  %s0 = inlined_call_operand.hbm [shape: bf16[16,1024], index: 0, kind: input, shape index: {}]
  %s1 = inlined_call_operand.hbm [shape: bf16[16,1024], index: 1, kind: input, shape index: {}]
  %s2 = inlined_call_operand.hbm [shape: bf16[1024,128], index: 2, kind: input, shape index: {}]
  %s3 = inlined_call_operand.vmem [shape: f32[1,128], index: 3, kind: input, shape index: {}]
  %s4 = inlined_call_operand.hbm [shape: bf16[1024,512], index: 4, kind: input, shape index: {}]
  %s5 = inlined_call_operand.vmem [shape: f32[1,512], index: 5, kind: input, shape index: {}]
  %s6 = inlined_call_operand.vmem [shape: f32[1,512], index: 6, kind: input, shape index: {}]
  %s7 = inlined_call_operand.<no memory space> [shape: f32[1,1], index: 7, kind: input, shape index: {}]
  %s8 = inlined_call_operand.hbm [shape: f32[16,128], index: 8, kind: output, shape index: {}]
  %s9 = sld [smem:[#allocation0]]
  $region66: #{tpu_custom_call.1} parent=0
    _
  %s11 = ssub.s32 1, %s9
  %s12 = scalar_select 0, %s11, %s9
  %v13 = vstv %s7
  %14 = vst [vmem:[#allocation4] sm:$0x1] %v13
  $region1: #{tpu_custom_call.1} parent=0
    #allocation5 [shape = 'u8[32768]{0}', space=vmem, size = 0x8000, scoped, tag = 'input window, operand 0, single buffered']
    #allocation6 [shape = 's32[1]{0}', space=sflag, size = 0x4, scoped, tag = 'scoped memory for tpu_custom_call.1']
    #allocation7 [shape = 's32[1]{0}', space=sflag, size = 0x4, scoped, tag = 'scoped memory for tpu_custom_call.1']
    #allocation8 [shape = 'u8[32768]{0}', space=vmem, size = 0x8000, scoped, tag = 'input window, operand 1, single buffered']
    #allocation9 [shape = 's32[1]{0}', space=sflag, size = 0x4, scoped, tag = 'scoped memory for tpu_custom_call.1']
    #allocation10 [shape = 'u8[262144]{0}', space=vmem, size = 0x40000, scoped, tag = 'input window, operand 2, single buffered']
    #allocation11 [shape = 'u8[1048576]{0}', space=vmem, size = 0x100000, scoped, tag = 'input window, operand 4, single buffered']
    #allocation12 [shape = 's32[1]{0}', space=sflag, size = 0x4, scoped, tag = 'scoped memory for tpu_custom_call.1']
    #allocation13 [shape = 'u8[8192]{0}', space=vmem, size = 0x2000, scoped, tag = 'output window, operand 0, single buffered']
    %15 = vsyncpa [#allocation6], 0
    %16 = vsyncpa [#allocation9], 0
    %17 = vsyncpa [#allocation12], 0
    %18 = vsyncpa [#allocation7], 0
    // Predicated region
    $region2: #{tpu_custom_call.1} parent=1 // pred_check
      _
    $region3: #{tpu_custom_call.1} parent=1 // pred_check_branch
      %20 = sbr.rel (0) target = $region5
    $region4: #{tpu_custom_call.1} parent=1 // pred_region
      %s22 = ssub.s32 1024, 1024
      %23 = vsyncadd [#allocation6], %s22
      %s24 = sshll.u32 [#allocation5], 4
      %s25 = int_to_ptr.vmem [resolvable:$true] %s24
      %30 = dma.hbm_to_vmem [thread:$0]  %s0, 1024, %s25, [#allocation6], 512, 512, 32
    $region5: #{tpu_custom_call.1} parent=1 // pred_fallthru
      _
    // Predicated region
    $region6: #{tpu_custom_call.1} parent=1 // pred_check
      _
    $region7: #{tpu_custom_call.1} parent=1 // pred_check_branch
      %32 = sbr.rel (0) target = $region9
    $region8: #{tpu_custom_call.1} parent=1 // pred_region
      %s34 = ssub.s32 1024, 1024
      %35 = vsyncadd [#allocation9], %s34
      %s36 = sshll.u32 [#allocation8], 4
      %s37 = int_to_ptr.vmem [resolvable:$true] %s36
      %42 = dma.hbm_to_vmem [thread:$0]  %s1, 1024, %s37, [#allocation9], 512, 512, 32
    $region9: #{tpu_custom_call.1} parent=1 // pred_fallthru
      _
    // Predicated region
    $region10: #{tpu_custom_call.1} parent=1 // pred_check
      _
    $region11: #{tpu_custom_call.1} parent=1 // pred_check_branch
      %44 = sbr.rel (0) target = $region13
    $region12: #{tpu_custom_call.1} parent=1 // pred_region
      %s46 = ssub.s32 8192, 8192
      %47 = vsyncadd [#allocation9], %s46
      %s48 = sshll.u32 [#allocation10], 4
      %s49 = int_to_ptr.vmem [resolvable:$true] %s48
      %54 = dma.hbm_to_vmem [thread:$0]  %s2, 8192, %s49, [#allocation9], 64, 64, 4
    $region13: #{tpu_custom_call.1} parent=1 // pred_fallthru
      _
    // Predicated region
    $region14: #{tpu_custom_call.1} parent=1 // pred_check
      _
    $region15: #{tpu_custom_call.1} parent=1 // pred_check_branch
      %56 = sbr.rel (0) target = $region17
    $region16: #{tpu_custom_call.1} parent=1 // pred_region
      _
    $region17: #{tpu_custom_call.1} parent=1 // pred_fallthru
      _
    // Predicated region
    $region18: #{tpu_custom_call.1} parent=1 // pred_check
      _
    $region19: #{tpu_custom_call.1} parent=1 // pred_check_branch
      %58 = sbr.rel (0) target = $region21
    $region20: #{tpu_custom_call.1} parent=1 // pred_region
      %s60 = ssub.s32 32768, 32768
      %61 = vsyncadd [#allocation12], %s60
      %s62 = sshll.u32 [#allocation11], 4
      %s63 = int_to_ptr.vmem [resolvable:$true] %s62
      %68 = dma.hbm_to_vmem [thread:$0]  %s4, 32768, %s63, [#allocation12], 256, 256, 16
    $region21: #{tpu_custom_call.1} parent=1 // pred_fallthru
      _
    // Predicated region
    $region22: #{tpu_custom_call.1} parent=1 // pred_check
      _
    $region23: #{tpu_custom_call.1} parent=1 // pred_check_branch
      %70 = sbr.rel (0) target = $region25
    $region24: #{tpu_custom_call.1} parent=1 // pred_region
      _
    $region25: #{tpu_custom_call.1} parent=1 // pred_fallthru
      _
    // Predicated region
    $region26: #{tpu_custom_call.1} parent=1 // pred_check
      _
    $region27: #{tpu_custom_call.1} parent=1 // pred_check_branch
      %72 = sbr.rel (0) target = $region29
    $region28: #{tpu_custom_call.1} parent=1 // pred_region
      _
    $region29: #{tpu_custom_call.1} parent=1 // pred_fallthru
      _
    // Predicated region
    $region30: #{tpu_custom_call.1} parent=1 // pred_check
      _
    $region31: #{tpu_custom_call.1} parent=1 // pred_check_branch
      %74 = sbr.rel (0) target = $region33
    $region32: #{tpu_custom_call.1} parent=1 // pred_region
      _
    $region33: #{tpu_custom_call.1} parent=1 // pred_fallthru
      _
    // Predicated region
    $region34: #{tpu_custom_call.1} parent=1 // pred_check
      _
    $region35: #{tpu_custom_call.1} parent=1 // pred_check_branch
      %76 = sbr.rel (0) target = $region37
    $region36: #{tpu_custom_call.1} parent=1 // pred_region
      %77 = dma.done [#allocation6], 1024
    $region37: #{tpu_custom_call.1} parent=1 // pred_fallthru
      _
    // Predicated region
    $region38: #{tpu_custom_call.1} parent=1 // pred_check
      _
    $region39: #{tpu_custom_call.1} parent=1 // pred_check_branch
      %79 = sbr.rel (0) target = $region41
    $region40: #{tpu_custom_call.1} parent=1 // pred_region
      %80 = dma.done [#allocation9], 1024
    $region41: #{tpu_custom_call.1} parent=1 // pred_fallthru
      _
    // Predicated region
    $region42: #{tpu_custom_call.1} parent=1 // pred_check
      _
    $region43: #{tpu_custom_call.1} parent=1 // pred_check_branch
      %82 = sbr.rel (0) target = $region45
    $region44: #{tpu_custom_call.1} parent=1 // pred_region
      %83 = dma.done [#allocation9], 8192
    $region45: #{tpu_custom_call.1} parent=1 // pred_fallthru
      _
    // Predicated region
    $region46: #{tpu_custom_call.1} parent=1 // pred_check
      _
    $region47: #{tpu_custom_call.1} parent=1 // pred_check_branch
      %85 = sbr.rel (0) target = $region49
    $region48: #{tpu_custom_call.1} parent=1 // pred_region
      %86 = dma.done [#allocation12], 32768
    $region49: #{tpu_custom_call.1} parent=1 // pred_fallthru
      _
    %p88 = scmp.eq.s32.totalorder 0, 0
    // Predicated region
    $region50: #{tpu_custom_call.1} parent=1 // pred_check
      %p89 = pneg %p88
    $region51: #{tpu_custom_call.1} parent=1 // pred_check_branch
      %91 = sbr.rel (%p89) target = $region53
    $region52: #{tpu_custom_call.1} parent=1 // pred_region
      %92 = vst [vmem:[#allocation2] sm:$0xff] 0.0
      %93 = vst [vmem:[#allocation2 + $0x8] sm:$0xff] 0.0
      %94 = vst [vmem:[#allocation3] sm:$0xff] 0.0
      %95 = vst [vmem:[#allocation3 + $0x8] sm:$0xff] 0.0
      %96 = vst [vmem:[#allocation3 + $0x10] sm:$0xff] 0.0
      %97 = vst [vmem:[#allocation3 + $0x18] sm:$0xff] 0.0
      %98 = vst [vmem:[#allocation3 + $0x20] sm:$0xff] 0.0
      %99 = vst [vmem:[#allocation3 + $0x28] sm:$0xff] 0.0
      %100 = vst [vmem:[#allocation3 + $0x30] sm:$0xff] 0.0
      %101 = vst [vmem:[#allocation3 + $0x38] sm:$0xff] 0.0
    $region53: #{tpu_custom_call.1} parent=1 // pred_fallthru
      _
    %v102 = vld [vmem:[#allocation5] sm:$0xff]
    %v103 = vld [vmem:[#allocation5 + $0x8] sm:$0xff]
    %v104 = vld [vmem:[#allocation5 + $0x10] sm:$0xff]
    %v105 = vld [vmem:[#allocation5 + $0x18] sm:$0xff]
    %v106 = vld [vmem:[#allocation5 + $0x20] sm:$0xff]
    %v107 = vld [vmem:[#allocation5 + $0x28] sm:$0xff]
    %v108 = vld [vmem:[#allocation5 + $0x30] sm:$0xff]
    %v109 = vld [vmem:[#allocation5 + $0x38] sm:$0xff]
    %v110 = vld [vmem:[#allocation8] sm:$0xff]
    %v111 = vld [vmem:[#allocation8 + $0x8] sm:$0xff]
    %v112 = vld [vmem:[#allocation8 + $0x10] sm:$0xff]
    %v113 = vld [vmem:[#allocation8 + $0x18] sm:$0xff]
    %v114 = vld [vmem:[#allocation8 + $0x20] sm:$0xff]
    %v115 = vld [vmem:[#allocation8 + $0x28] sm:$0xff]
    %v116 = vld [vmem:[#allocation8 + $0x30] sm:$0xff]
    %v117 = vld [vmem:[#allocation8 + $0x38] sm:$0xff]
    %s118 = smul.u32 0, 1024
    %s119 = sshra.s32 %s118, 3
    %s120 = sand.u32 %s118, 7
    %s121 = smul.addr %s119, 4
    %s122 = scalar_lea.vmem [#allocation10], %s121
    %v123 = vld [vmem:[%s122] sm:$0xf]
    %v124 = vld [vmem:[%s122 + $0x4] sm:$0xf]
    %v125 = vld [vmem:[%s122 + $0x8] sm:$0xf]
    %v126 = vld [vmem:[%s122 + $0xc] sm:$0xf]
    %v127 = vld [vmem:[%s122 + $0x10] sm:$0xf]
    %v128 = vld [vmem:[%s122 + $0x14] sm:$0xf]
    %v129 = vld [vmem:[%s122 + $0x18] sm:$0xf]
    %v130 = vld [vmem:[%s122 + $0x1c] sm:$0xf]
    %v131 = vld [vmem:[%s122 + $0x20] sm:$0xf]
    %v132 = vld [vmem:[%s122 + $0x24] sm:$0xf]
    %v133 = vld [vmem:[%s122 + $0x28] sm:$0xf]
    %v134 = vld [vmem:[%s122 + $0x2c] sm:$0xf]
    %v135 = vld [vmem:[%s122 + $0x30] sm:$0xf]
    %v136 = vld [vmem:[%s122 + $0x34] sm:$0xf]
    %v137 = vld [vmem:[%s122 + $0x38] sm:$0xf]
    %v138 = vld [vmem:[%s122 + $0x3c] sm:$0xf]
    %v139 = vld [vmem:[%s122 + $0x40] sm:$0xf]
    %v140 = vld [vmem:[%s122 + $0x44] sm:$0xf]
    %v141 = vld [vmem:[%s122 + $0x48] sm:$0xf]
    %v142 = vld [vmem:[%s122 + $0x4c] sm:$0xf]
    %v143 = vld [vmem:[%s122 + $0x50] sm:$0xf]
    %v144 = vld [vmem:[%s122 + $0x54] sm:$0xf]
    %v145 = vld [vmem:[%s122 + $0x58] sm:$0xf]
    %v146 = vld [vmem:[%s122 + $0x5c] sm:$0xf]
    %v147 = vld [vmem:[%s122 + $0x60] sm:$0xf]
    %v148 = vld [vmem:[%s122 + $0x64] sm:$0xf]
    %v149 = vld [vmem:[%s122 + $0x68] sm:$0xf]
    %v150 = vld [vmem:[%s122 + $0x6c] sm:$0xf]
    %v151 = vld [vmem:[%s122 + $0x70] sm:$0xf]
    %v152 = vld [vmem:[%s122 + $0x74] sm:$0xf]
    %v153 = vld [vmem:[%s122 + $0x78] sm:$0xf]
    %v154 = vld [vmem:[%s122 + $0x7c] sm:$0xf]
    %v155 = vld [vmem:[%s122 + $0x80] sm:$0xf]
    %v156 = vld [vmem:[%s122 + $0x84] sm:$0xf]
    %v157 = vld [vmem:[%s122 + $0x88] sm:$0xf]
    %v158 = vld [vmem:[%s122 + $0x8c] sm:$0xf]
    %v159 = vld [vmem:[%s122 + $0x90] sm:$0xf]
    %v160 = vld [vmem:[%s122 + $0x94] sm:$0xf]
    %v161 = vld [vmem:[%s122 + $0x98] sm:$0xf]
    %v162 = vld [vmem:[%s122 + $0x9c] sm:$0xf]
    %v163 = vld [vmem:[%s122 + $0xa0] sm:$0xf]
    %v164 = vld [vmem:[%s122 + $0xa4] sm:$0xf]
    %v165 = vld [vmem:[%s122 + $0xa8] sm:$0xf]
    %v166 = vld [vmem:[%s122 + $0xac] sm:$0xf]
    %v167 = vld [vmem:[%s122 + $0xb0] sm:$0xf]
    %v168 = vld [vmem:[%s122 + $0xb4] sm:$0xf]
    %v169 = vld [vmem:[%s122 + $0xb8] sm:$0xf]
    %v170 = vld [vmem:[%s122 + $0xbc] sm:$0xf]
    %v171 = vld [vmem:[%s122 + $0xc0] sm:$0xf]
    %v172 = vld [vmem:[%s122 + $0xc4] sm:$0xf]
    %v173 = vld [vmem:[%s122 + $0xc8] sm:$0xf]
    %v174 = vld [vmem:[%s122 + $0xcc] sm:$0xf]
    %v175 = vld [vmem:[%s122 + $0xd0] sm:$0xf]
    %v176 = vld [vmem:[%s122 + $0xd4] sm:$0xf]
    %v177 = vld [vmem:[%s122 + $0xd8] sm:$0xf]
    %v178 = vld [vmem:[%s122 + $0xdc] sm:$0xf]
    %v179 = vld [vmem:[%s122 + $0xe0] sm:$0xf]
    %v180 = vld [vmem:[%s122 + $0xe4] sm:$0xf]
    %v181 = vld [vmem:[%s122 + $0xe8] sm:$0xf]
    %v182 = vld [vmem:[%s122 + $0xec] sm:$0xf]
    %v183 = vld [vmem:[%s122 + $0xf0] sm:$0xf]
    %v184 = vld [vmem:[%s122 + $0xf4] sm:$0xf]
    %v185 = vld [vmem:[%s122 + $0xf8] sm:$0xf]
    %v186 = vld [vmem:[%s122 + $0xfc] sm:$0xf]
    %v187 = vld [vmem:[%s122 + $0x100] sm:$0xf]
    %v188 = vld [vmem:[%s122 + $0x104] sm:$0xf]
    %v189 = vld [vmem:[%s122 + $0x108] sm:$0xf]
    %v190 = vld [vmem:[%s122 + $0x10c] sm:$0xf]
    %v191 = vld [vmem:[%s122 + $0x110] sm:$0xf]
    %v192 = vld [vmem:[%s122 + $0x114] sm:$0xf]
    %v193 = vld [vmem:[%s122 + $0x118] sm:$0xf]
    %v194 = vld [vmem:[%s122 + $0x11c] sm:$0xf]
    %v195 = vld [vmem:[%s122 + $0x120] sm:$0xf]
    %v196 = vld [vmem:[%s122 + $0x124] sm:$0xf]
    %v197 = vld [vmem:[%s122 + $0x128] sm:$0xf]
    %v198 = vld [vmem:[%s122 + $0x12c] sm:$0xf]
    %v199 = vld [vmem:[%s122 + $0x130] sm:$0xf]
    %v200 = vld [vmem:[%s122 + $0x134] sm:$0xf]
    %v201 = vld [vmem:[%s122 + $0x138] sm:$0xf]
    %v202 = vld [vmem:[%s122 + $0x13c] sm:$0xf]
    %v203 = vld [vmem:[%s122 + $0x140] sm:$0xf]
    %v204 = vld [vmem:[%s122 + $0x144] sm:$0xf]
    %v205 = vld [vmem:[%s122 + $0x148] sm:$0xf]
    %v206 = vld [vmem:[%s122 + $0x14c] sm:$0xf]
    %v207 = vld [vmem:[%s122 + $0x150] sm:$0xf]
    %v208 = vld [vmem:[%s122 + $0x154] sm:$0xf]
    %v209 = vld [vmem:[%s122 + $0x158] sm:$0xf]
    %v210 = vld [vmem:[%s122 + $0x15c] sm:$0xf]
    %v211 = vld [vmem:[%s122 + $0x160] sm:$0xf]
    %v212 = vld [vmem:[%s122 + $0x164] sm:$0xf]
    %v213 = vld [vmem:[%s122 + $0x168] sm:$0xf]
    %v214 = vld [vmem:[%s122 + $0x16c] sm:$0xf]
    %v215 = vld [vmem:[%s122 + $0x170] sm:$0xf]
    %v216 = vld [vmem:[%s122 + $0x174] sm:$0xf]
    %v217 = vld [vmem:[%s122 + $0x178] sm:$0xf]
    %v218 = vld [vmem:[%s122 + $0x17c] sm:$0xf]
    %v219 = vld [vmem:[%s122 + $0x180] sm:$0xf]
    %v220 = vld [vmem:[%s122 + $0x184] sm:$0xf]
    %v221 = vld [vmem:[%s122 + $0x188] sm:$0xf]
    %v222 = vld [vmem:[%s122 + $0x18c] sm:$0xf]
    %v223 = vld [vmem:[%s122 + $0x190] sm:$0xf]
    %v224 = vld [vmem:[%s122 + $0x194] sm:$0xf]
    %v225 = vld [vmem:[%s122 + $0x198] sm:$0xf]
    %v226 = vld [vmem:[%s122 + $0x19c] sm:$0xf]
    %v227 = vld [vmem:[%s122 + $0x1a0] sm:$0xf]
    %v228 = vld [vmem:[%s122 + $0x1a4] sm:$0xf]
    %v229 = vld [vmem:[%s122 + $0x1a8] sm:$0xf]
    %v230 = vld [vmem:[%s122 + $0x1ac] sm:$0xf]
    %v231 = vld [vmem:[%s122 + $0x1b0] sm:$0xf]
    %v232 = vld [vmem:[%s122 + $0x1b4] sm:$0xf]
    %v233 = vld [vmem:[%s122 + $0x1b8] sm:$0xf]
    %v234 = vld [vmem:[%s122 + $0x1bc] sm:$0xf]
    %v235 = vld [vmem:[%s122 + $0x1c0] sm:$0xf]
    %v236 = vld [vmem:[%s122 + $0x1c4] sm:$0xf]
    %v237 = vld [vmem:[%s122 + $0x1c8] sm:$0xf]
    %v238 = vld [vmem:[%s122 + $0x1cc] sm:$0xf]
    %v239 = vld [vmem:[%s122 + $0x1d0] sm:$0xf]
    %v240 = vld [vmem:[%s122 + $0x1d4] sm:$0xf]
    %v241 = vld [vmem:[%s122 + $0x1d8] sm:$0xf]
    %v242 = vld [vmem:[%s122 + $0x1dc] sm:$0xf]
    %v243 = vld [vmem:[%s122 + $0x1e0] sm:$0xf]
    %v244 = vld [vmem:[%s122 + $0x1e4] sm:$0xf]
    %v245 = vld [vmem:[%s122 + $0x1e8] sm:$0xf]
    %v246 = vld [vmem:[%s122 + $0x1ec] sm:$0xf]
    %v247 = vld [vmem:[%s122 + $0x1f0] sm:$0xf]
    %v248 = vld [vmem:[%s122 + $0x1f4] sm:$0xf]
    %v249 = vld [vmem:[%s122 + $0x1f8] sm:$0xf]
    %v250 = vld [vmem:[%s122 + $0x1fc] sm:$0xf]
    %s251 = smul.u32 %s119, 4
    %s252 = smul.addr %s251, 4
    %s253 = scalar_lea.vmem [#allocation11], %s252
    %v254 = vld [vmem:[%s253] sm:$0xff]
    %v255 = vld [vmem:[%s253 + $0x8] sm:$0xff]
    %v256 = vld [vmem:[%s253 + $0x10] sm:$0xff]
    %v257 = vld [vmem:[%s253 + $0x18] sm:$0xff]
    %v258 = vld [vmem:[%s253 + $0x20] sm:$0xff]
    %v259 = vld [vmem:[%s253 + $0x28] sm:$0xff]
    %v260 = vld [vmem:[%s253 + $0x30] sm:$0xff]
    %v261 = vld [vmem:[%s253 + $0x38] sm:$0xff]
    %v262 = vld [vmem:[%s253 + $0x40] sm:$0xff]
    %v263 = vld [vmem:[%s253 + $0x48] sm:$0xff]
    %v264 = vld [vmem:[%s253 + $0x50] sm:$0xff]
    %v265 = vld [vmem:[%s253 + $0x58] sm:$0xff]
    %v266 = vld [vmem:[%s253 + $0x60] sm:$0xff]
    %v267 = vld [vmem:[%s253 + $0x68] sm:$0xff]
    %v268 = vld [vmem:[%s253 + $0x70] sm:$0xff]
    %v269 = vld [vmem:[%s253 + $0x78] sm:$0xff]
    %v270 = vld [vmem:[%s253 + $0x80] sm:$0xff]
    %v271 = vld [vmem:[%s253 + $0x88] sm:$0xff]
    %v272 = vld [vmem:[%s253 + $0x90] sm:$0xff]
    %v273 = vld [vmem:[%s253 + $0x98] sm:$0xff]
    %v274 = vld [vmem:[%s253 + $0xa0] sm:$0xff]
    %v275 = vld [vmem:[%s253 + $0xa8] sm:$0xff]
    %v276 = vld [vmem:[%s253 + $0xb0] sm:$0xff]
    %v277 = vld [vmem:[%s253 + $0xb8] sm:$0xff]
    %v278 = vld [vmem:[%s253 + $0xc0] sm:$0xff]
    %v279 = vld [vmem:[%s253 + $0xc8] sm:$0xff]
    %v280 = vld [vmem:[%s253 + $0xd0] sm:$0xff]
    %v281 = vld [vmem:[%s253 + $0xd8] sm:$0xff]
    %v282 = vld [vmem:[%s253 + $0xe0] sm:$0xff]
    %v283 = vld [vmem:[%s253 + $0xe8] sm:$0xff]
    %v284 = vld [vmem:[%s253 + $0xf0] sm:$0xff]
    %v285 = vld [vmem:[%s253 + $0xf8] sm:$0xff]
    %v286 = vld [vmem:[%s253 + $0x100] sm:$0xff]
    %v287 = vld [vmem:[%s253 + $0x108] sm:$0xff]
    %v288 = vld [vmem:[%s253 + $0x110] sm:$0xff]
    %v289 = vld [vmem:[%s253 + $0x118] sm:$0xff]
    %v290 = vld [vmem:[%s253 + $0x120] sm:$0xff]
    %v291 = vld [vmem:[%s253 + $0x128] sm:$0xff]
    %v292 = vld [vmem:[%s253 + $0x130] sm:$0xff]
    %v293 = vld [vmem:[%s253 + $0x138] sm:$0xff]
    %v294 = vld [vmem:[%s253 + $0x140] sm:$0xff]
    %v295 = vld [vmem:[%s253 + $0x148] sm:$0xff]
    %v296 = vld [vmem:[%s253 + $0x150] sm:$0xff]
    %v297 = vld [vmem:[%s253 + $0x158] sm:$0xff]
    %v298 = vld [vmem:[%s253 + $0x160] sm:$0xff]
    %v299 = vld [vmem:[%s253 + $0x168] sm:$0xff]
    %v300 = vld [vmem:[%s253 + $0x170] sm:$0xff]
    %v301 = vld [vmem:[%s253 + $0x178] sm:$0xff]
    %v302 = vld [vmem:[%s253 + $0x180] sm:$0xff]
    %v303 = vld [vmem:[%s253 + $0x188] sm:$0xff]
    %v304 = vld [vmem:[%s253 + $0x190] sm:$0xff]
    %v305 = vld [vmem:[%s253 + $0x198] sm:$0xff]
    %v306 = vld [vmem:[%s253 + $0x1a0] sm:$0xff]
    %v307 = vld [vmem:[%s253 + $0x1a8] sm:$0xff]
    %v308 = vld [vmem:[%s253 + $0x1b0] sm:$0xff]
    %v309 = vld [vmem:[%s253 + $0x1b8] sm:$0xff]
    %v310 = vld [vmem:[%s253 + $0x1c0] sm:$0xff]
    %v311 = vld [vmem:[%s253 + $0x1c8] sm:$0xff]
    %v312 = vld [vmem:[%s253 + $0x1d0] sm:$0xff]
    %v313 = vld [vmem:[%s253 + $0x1d8] sm:$0xff]
    %v314 = vld [vmem:[%s253 + $0x1e0] sm:$0xff]
    %v315 = vld [vmem:[%s253 + $0x1e8] sm:$0xff]
    %v316 = vld [vmem:[%s253 + $0x1f0] sm:$0xff]
    %v317 = vld [vmem:[%s253 + $0x1f8] sm:$0xff]
    %v318 = vld [vmem:[%s253 + $0x200] sm:$0xff]
    %v319 = vld [vmem:[%s253 + $0x208] sm:$0xff]
    %v320 = vld [vmem:[%s253 + $0x210] sm:$0xff]
    %v321 = vld [vmem:[%s253 + $0x218] sm:$0xff]
    %v322 = vld [vmem:[%s253 + $0x220] sm:$0xff]
    %v323 = vld [vmem:[%s253 + $0x228] sm:$0xff]
    %v324 = vld [vmem:[%s253 + $0x230] sm:$0xff]
    %v325 = vld [vmem:[%s253 + $0x238] sm:$0xff]
    %v326 = vld [vmem:[%s253 + $0x240] sm:$0xff]
    %v327 = vld [vmem:[%s253 + $0x248] sm:$0xff]
    %v328 = vld [vmem:[%s253 + $0x250] sm:$0xff]
    %v329 = vld [vmem:[%s253 + $0x258] sm:$0xff]
    %v330 = vld [vmem:[%s253 + $0x260] sm:$0xff]
    %v331 = vld [vmem:[%s253 + $0x268] sm:$0xff]
    %v332 = vld [vmem:[%s253 + $0x270] sm:$0xff]
    %v333 = vld [vmem:[%s253 + $0x278] sm:$0xff]
    %v334 = vld [vmem:[%s253 + $0x280] sm:$0xff]
    %v335 = vld [vmem:[%s253 + $0x288] sm:$0xff]
    %v336 = vld [vmem:[%s253 + $0x290] sm:$0xff]
    %v337 = vld [vmem:[%s253 + $0x298] sm:$0xff]
    %v338 = vld [vmem:[%s253 + $0x2a0] sm:$0xff]
    %v339 = vld [vmem:[%s253 + $0x2a8] sm:$0xff]
    %v340 = vld [vmem:[%s253 + $0x2b0] sm:$0xff]
    %v341 = vld [vmem:[%s253 + $0x2b8] sm:$0xff]
    %v342 = vld [vmem:[%s253 + $0x2c0] sm:$0xff]
    %v343 = vld [vmem:[%s253 + $0x2c8] sm:$0xff]
    %v344 = vld [vmem:[%s253 + $0x2d0] sm:$0xff]
    %v345 = vld [vmem:[%s253 + $0x2d8] sm:$0xff]
    %v346 = vld [vmem:[%s253 + $0x2e0] sm:$0xff]
    %v347 = vld [vmem:[%s253 + $0x2e8] sm:$0xff]
    %v348 = vld [vmem:[%s253 + $0x2f0] sm:$0xff]
    %v349 = vld [vmem:[%s253 + $0x2f8] sm:$0xff]
    %v350 = vld [vmem:[%s253 + $0x300] sm:$0xff]
    %v351 = vld [vmem:[%s253 + $0x308] sm:$0xff]
    %v352 = vld [vmem:[%s253 + $0x310] sm:$0xff]
    %v353 = vld [vmem:[%s253 + $0x318] sm:$0xff]
    %v354 = vld [vmem:[%s253 + $0x320] sm:$0xff]
    %v355 = vld [vmem:[%s253 + $0x328] sm:$0xff]
    %v356 = vld [vmem:[%s253 + $0x330] sm:$0xff]
    %v357 = vld [vmem:[%s253 + $0x338] sm:$0xff]
    %v358 = vld [vmem:[%s253 + $0x340] sm:$0xff]
    %v359 = vld [vmem:[%s253 + $0x348] sm:$0xff]
    %v360 = vld [vmem:[%s253 + $0x350] sm:$0xff]
    %v361 = vld [vmem:[%s253 + $0x358] sm:$0xff]
    %v362 = vld [vmem:[%s253 + $0x360] sm:$0xff]
    %v363 = vld [vmem:[%s253 + $0x368] sm:$0xff]
    %v364 = vld [vmem:[%s253 + $0x370] sm:$0xff]
    %v365 = vld [vmem:[%s253 + $0x378] sm:$0xff]
    %v366 = vld [vmem:[%s253 + $0x380] sm:$0xff]
    %v367 = vld [vmem:[%s253 + $0x388] sm:$0xff]
    %v368 = vld [vmem:[%s253 + $0x390] sm:$0xff]
    %v369 = vld [vmem:[%s253 + $0x398] sm:$0xff]
    %v370 = vld [vmem:[%s253 + $0x3a0] sm:$0xff]
    %v371 = vld [vmem:[%s253 + $0x3a8] sm:$0xff]
    %v372 = vld [vmem:[%s253 + $0x3b0] sm:$0xff]
    %v373 = vld [vmem:[%s253 + $0x3b8] sm:$0xff]
    %v374 = vld [vmem:[%s253 + $0x3c0] sm:$0xff]
    %v375 = vld [vmem:[%s253 + $0x3c8] sm:$0xff]
    %v376 = vld [vmem:[%s253 + $0x3d0] sm:$0xff]
    %v377 = vld [vmem:[%s253 + $0x3d8] sm:$0xff]
    %v378 = vld [vmem:[%s253 + $0x3e0] sm:$0xff]
    %v379 = vld [vmem:[%s253 + $0x3e8] sm:$0xff]
    %v380 = vld [vmem:[%s253 + $0x3f0] sm:$0xff]
    %v381 = vld [vmem:[%s253 + $0x3f8] sm:$0xff]
    %v382 = vld [vmem:[%s253 + $0x400] sm:$0xff]
    %v383 = vld [vmem:[%s253 + $0x408] sm:$0xff]
    %v384 = vld [vmem:[%s253 + $0x410] sm:$0xff]
    %v385 = vld [vmem:[%s253 + $0x418] sm:$0xff]
    %v386 = vld [vmem:[%s253 + $0x420] sm:$0xff]
    %v387 = vld [vmem:[%s253 + $0x428] sm:$0xff]
    %v388 = vld [vmem:[%s253 + $0x430] sm:$0xff]
    %v389 = vld [vmem:[%s253 + $0x438] sm:$0xff]
    %v390 = vld [vmem:[%s253 + $0x440] sm:$0xff]
    %v391 = vld [vmem:[%s253 + $0x448] sm:$0xff]
    %v392 = vld [vmem:[%s253 + $0x450] sm:$0xff]
    %v393 = vld [vmem:[%s253 + $0x458] sm:$0xff]
    %v394 = vld [vmem:[%s253 + $0x460] sm:$0xff]
    %v395 = vld [vmem:[%s253 + $0x468] sm:$0xff]
    %v396 = vld [vmem:[%s253 + $0x470] sm:$0xff]
    %v397 = vld [vmem:[%s253 + $0x478] sm:$0xff]
    %v398 = vld [vmem:[%s253 + $0x480] sm:$0xff]
    %v399 = vld [vmem:[%s253 + $0x488] sm:$0xff]
    %v400 = vld [vmem:[%s253 + $0x490] sm:$0xff]
    %v401 = vld [vmem:[%s253 + $0x498] sm:$0xff]
    %v402 = vld [vmem:[%s253 + $0x4a0] sm:$0xff]
    %v403 = vld [vmem:[%s253 + $0x4a8] sm:$0xff]
    %v404 = vld [vmem:[%s253 + $0x4b0] sm:$0xff]
    %v405 = vld [vmem:[%s253 + $0x4b8] sm:$0xff]
    %v406 = vld [vmem:[%s253 + $0x4c0] sm:$0xff]
    %v407 = vld [vmem:[%s253 + $0x4c8] sm:$0xff]
    %v408 = vld [vmem:[%s253 + $0x4d0] sm:$0xff]
    %v409 = vld [vmem:[%s253 + $0x4d8] sm:$0xff]
    %v410 = vld [vmem:[%s253 + $0x4e0] sm:$0xff]
    %v411 = vld [vmem:[%s253 + $0x4e8] sm:$0xff]
    %v412 = vld [vmem:[%s253 + $0x4f0] sm:$0xff]
    %v413 = vld [vmem:[%s253 + $0x4f8] sm:$0xff]
    %v414 = vld [vmem:[%s253 + $0x500] sm:$0xff]
    %v415 = vld [vmem:[%s253 + $0x508] sm:$0xff]
    %v416 = vld [vmem:[%s253 + $0x510] sm:$0xff]
    %v417 = vld [vmem:[%s253 + $0x518] sm:$0xff]
    %v418 = vld [vmem:[%s253 + $0x520] sm:$0xff]
    %v419 = vld [vmem:[%s253 + $0x528] sm:$0xff]
    %v420 = vld [vmem:[%s253 + $0x530] sm:$0xff]
    %v421 = vld [vmem:[%s253 + $0x538] sm:$0xff]
    %v422 = vld [vmem:[%s253 + $0x540] sm:$0xff]
    %v423 = vld [vmem:[%s253 + $0x548] sm:$0xff]
    %v424 = vld [vmem:[%s253 + $0x550] sm:$0xff]
    %v425 = vld [vmem:[%s253 + $0x558] sm:$0xff]
    %v426 = vld [vmem:[%s253 + $0x560] sm:$0xff]
    %v427 = vld [vmem:[%s253 + $0x568] sm:$0xff]
    %v428 = vld [vmem:[%s253 + $0x570] sm:$0xff]
    %v429 = vld [vmem:[%s253 + $0x578] sm:$0xff]
    %v430 = vld [vmem:[%s253 + $0x580] sm:$0xff]
    %v431 = vld [vmem:[%s253 + $0x588] sm:$0xff]
    %v432 = vld [vmem:[%s253 + $0x590] sm:$0xff]
    %v433 = vld [vmem:[%s253 + $0x598] sm:$0xff]
    %v434 = vld [vmem:[%s253 + $0x5a0] sm:$0xff]
    %v435 = vld [vmem:[%s253 + $0x5a8] sm:$0xff]
    %v436 = vld [vmem:[%s253 + $0x5b0] sm:$0xff]
    %v437 = vld [vmem:[%s253 + $0x5b8] sm:$0xff]
    %v438 = vld [vmem:[%s253 + $0x5c0] sm:$0xff]
    %v439 = vld [vmem:[%s253 + $0x5c8] sm:$0xff]
    %v440 = vld [vmem:[%s253 + $0x5d0] sm:$0xff]
    %v441 = vld [vmem:[%s253 + $0x5d8] sm:$0xff]
    %v442 = vld [vmem:[%s253 + $0x5e0] sm:$0xff]
    %v443 = vld [vmem:[%s253 + $0x5e8] sm:$0xff]
    %v444 = vld [vmem:[%s253 + $0x5f0] sm:$0xff]
    %v445 = vld [vmem:[%s253 + $0x5f8] sm:$0xff]
    %v446 = vld [vmem:[%s253 + $0x600] sm:$0xff]
    %v447 = vld [vmem:[%s253 + $0x608] sm:$0xff]
    %v448 = vld [vmem:[%s253 + $0x610] sm:$0xff]
    %v449 = vld [vmem:[%s253 + $0x618] sm:$0xff]
    %v450 = vld [vmem:[%s253 + $0x620] sm:$0xff]
    %v451 = vld [vmem:[%s253 + $0x628] sm:$0xff]
    %v452 = vld [vmem:[%s253 + $0x630] sm:$0xff]
    %v453 = vld [vmem:[%s253 + $0x638] sm:$0xff]
    %v454 = vld [vmem:[%s253 + $0x640] sm:$0xff]
    %v455 = vld [vmem:[%s253 + $0x648] sm:$0xff]
    %v456 = vld [vmem:[%s253 + $0x650] sm:$0xff]
    %v457 = vld [vmem:[%s253 + $0x658] sm:$0xff]
    %v458 = vld [vmem:[%s253 + $0x660] sm:$0xff]
    %v459 = vld [vmem:[%s253 + $0x668] sm:$0xff]
    %v460 = vld [vmem:[%s253 + $0x670] sm:$0xff]
    %v461 = vld [vmem:[%s253 + $0x678] sm:$0xff]
    %v462 = vld [vmem:[%s253 + $0x680] sm:$0xff]
    %v463 = vld [vmem:[%s253 + $0x688] sm:$0xff]
    %v464 = vld [vmem:[%s253 + $0x690] sm:$0xff]
    %v465 = vld [vmem:[%s253 + $0x698] sm:$0xff]
    %v466 = vld [vmem:[%s253 + $0x6a0] sm:$0xff]
    %v467 = vld [vmem:[%s253 + $0x6a8] sm:$0xff]
    %v468 = vld [vmem:[%s253 + $0x6b0] sm:$0xff]
    %v469 = vld [vmem:[%s253 + $0x6b8] sm:$0xff]
    %v470 = vld [vmem:[%s253 + $0x6c0] sm:$0xff]
    %v471 = vld [vmem:[%s253 + $0x6c8] sm:$0xff]
    %v472 = vld [vmem:[%s253 + $0x6d0] sm:$0xff]
    %v473 = vld [vmem:[%s253 + $0x6d8] sm:$0xff]
    %v474 = vld [vmem:[%s253 + $0x6e0] sm:$0xff]
    %v475 = vld [vmem:[%s253 + $0x6e8] sm:$0xff]
    %v476 = vld [vmem:[%s253 + $0x6f0] sm:$0xff]
    %v477 = vld [vmem:[%s253 + $0x6f8] sm:$0xff]
    %v478 = vld [vmem:[%s253 + $0x700] sm:$0xff]
    %v479 = vld [vmem:[%s253 + $0x708] sm:$0xff]
    %v480 = vld [vmem:[%s253 + $0x710] sm:$0xff]
    %v481 = vld [vmem:[%s253 + $0x718] sm:$0xff]
    %v482 = vld [vmem:[%s253 + $0x720] sm:$0xff]
    %v483 = vld [vmem:[%s253 + $0x728] sm:$0xff]
    %v484 = vld [vmem:[%s253 + $0x730] sm:$0xff]
    %v485 = vld [vmem:[%s253 + $0x738] sm:$0xff]
    %v486 = vld [vmem:[%s253 + $0x740] sm:$0xff]
    %v487 = vld [vmem:[%s253 + $0x748] sm:$0xff]
    %v488 = vld [vmem:[%s253 + $0x750] sm:$0xff]
    %v489 = vld [vmem:[%s253 + $0x758] sm:$0xff]
    %v490 = vld [vmem:[%s253 + $0x760] sm:$0xff]
    %v491 = vld [vmem:[%s253 + $0x768] sm:$0xff]
    %v492 = vld [vmem:[%s253 + $0x770] sm:$0xff]
    %v493 = vld [vmem:[%s253 + $0x778] sm:$0xff]
    %v494 = vld [vmem:[%s253 + $0x780] sm:$0xff]
    %v495 = vld [vmem:[%s253 + $0x788] sm:$0xff]
    %v496 = vld [vmem:[%s253 + $0x790] sm:$0xff]
    %v497 = vld [vmem:[%s253 + $0x798] sm:$0xff]
    %v498 = vld [vmem:[%s253 + $0x7a0] sm:$0xff]
    %v499 = vld [vmem:[%s253 + $0x7a8] sm:$0xff]
    %v500 = vld [vmem:[%s253 + $0x7b0] sm:$0xff]
    %v501 = vld [vmem:[%s253 + $0x7b8] sm:$0xff]
    %v502 = vld [vmem:[%s253 + $0x7c0] sm:$0xff]
    %v503 = vld [vmem:[%s253 + $0x7c8] sm:$0xff]
    %v504 = vld [vmem:[%s253 + $0x7d0] sm:$0xff]
    %v505 = vld [vmem:[%s253 + $0x7d8] sm:$0xff]
    %v506 = vld [vmem:[%s253 + $0x7e0] sm:$0xff]
    %v507 = vld [vmem:[%s253 + $0x7e8] sm:$0xff]
    %v508 = vld [vmem:[%s253 + $0x7f0] sm:$0xff]
    %v509 = vld [vmem:[%s253 + $0x7f8] sm:$0xff]
    %v510 = vld [vmem:[#allocation2] sm:$0xff]
    %v511 = vld [vmem:[#allocation2 + $0x8] sm:$0xff]
    %v520 = vunpack.c.l.b16 %v102
    %v521 = vunpack.c.h.b16 %v102
    %v522 = vunpack.c.l.b16 %v103
    %v523 = vunpack.c.h.b16 %v103
    %v524 = vunpack.c.l.b16 %v104
    %v525 = vunpack.c.h.b16 %v104
    %v526 = vunpack.c.l.b16 %v105
    %v527 = vunpack.c.h.b16 %v105
    %v528 = vunpack.c.l.b16 %v106
    %v529 = vunpack.c.h.b16 %v106
    %v530 = vunpack.c.l.b16 %v107
    %v531 = vunpack.c.h.b16 %v107
    %v532 = vunpack.c.l.b16 %v108
    %v533 = vunpack.c.h.b16 %v108
    %v534 = vunpack.c.l.b16 %v109
    %v535 = vunpack.c.h.b16 %v109
    %v536 = vpack.c.b16 %v528, %v520
    %v537 = vpack.c.b16 %v529, %v521
    %v538 = vpack.c.b16 %v530, %v522
    %v539 = vpack.c.b16 %v531, %v523
    %v540 = vpack.c.b16 %v532, %v524
    %v541 = vpack.c.b16 %v533, %v525
    %v542 = vpack.c.b16 %v534, %v526
    %v543 = vpack.c.b16 %v535, %v527
    %v680 = vunpack.c.l.b16 %v123
    %v681 = vunpack.c.l.b16 %v124
    %v682 = vunpack.c.l.b16 %v125
    %v683 = vunpack.c.l.b16 %v126
    %v684 = vunpack.c.l.b16 %v127
    %v685 = vunpack.c.l.b16 %v128
    %v686 = vunpack.c.l.b16 %v129
    %v687 = vunpack.c.l.b16 %v130
    %v688 = vunpack.c.l.b16 %v131
    %v689 = vunpack.c.l.b16 %v132
    %v690 = vunpack.c.l.b16 %v133
    %v691 = vunpack.c.l.b16 %v134
    %v692 = vunpack.c.l.b16 %v135
    %v693 = vunpack.c.l.b16 %v136
    %v694 = vunpack.c.l.b16 %v137
    %v695 = vunpack.c.l.b16 %v138
    %v696 = vunpack.c.l.b16 %v139
    %v697 = vunpack.c.l.b16 %v140
    %v698 = vunpack.c.l.b16 %v141
    %v699 = vunpack.c.l.b16 %v142
    %v700 = vunpack.c.l.b16 %v143
    %v701 = vunpack.c.l.b16 %v144
    %v702 = vunpack.c.l.b16 %v145
    %v703 = vunpack.c.l.b16 %v146
    %v704 = vunpack.c.l.b16 %v147
    %v705 = vunpack.c.l.b16 %v148
    %v706 = vunpack.c.l.b16 %v149
    %v707 = vunpack.c.l.b16 %v150
    %v708 = vunpack.c.l.b16 %v151
    %v709 = vunpack.c.l.b16 %v152
    %v710 = vunpack.c.l.b16 %v153
    %v711 = vunpack.c.l.b16 %v154
    %v712 = vunpack.c.l.b16 %v155
    %v713 = vunpack.c.l.b16 %v156
    %v714 = vunpack.c.l.b16 %v157
    %v715 = vunpack.c.l.b16 %v158
    %v716 = vunpack.c.l.b16 %v159
    %v717 = vunpack.c.l.b16 %v160
    %v718 = vunpack.c.l.b16 %v161
    %v719 = vunpack.c.l.b16 %v162
    %v720 = vunpack.c.l.b16 %v163
    %v721 = vunpack.c.l.b16 %v164
    %v722 = vunpack.c.l.b16 %v165
    %v723 = vunpack.c.l.b16 %v166
    %v724 = vunpack.c.l.b16 %v167
    %v725 = vunpack.c.l.b16 %v168
    %v726 = vunpack.c.l.b16 %v169
    %v727 = vunpack.c.l.b16 %v170
    %v728 = vunpack.c.l.b16 %v171
    %v729 = vunpack.c.l.b16 %v172
    %v730 = vunpack.c.l.b16 %v173
    %v731 = vunpack.c.l.b16 %v174
    %v732 = vunpack.c.l.b16 %v175
    %v733 = vunpack.c.l.b16 %v176
    %v734 = vunpack.c.l.b16 %v177
    %v735 = vunpack.c.l.b16 %v178
    %v736 = vunpack.c.l.b16 %v179
    %v737 = vunpack.c.l.b16 %v180
    %v738 = vunpack.c.l.b16 %v181
    %v739 = vunpack.c.l.b16 %v182
    %v740 = vunpack.c.l.b16 %v183
    %v741 = vunpack.c.l.b16 %v184
    %v742 = vunpack.c.l.b16 %v185
    %v743 = vunpack.c.l.b16 %v186
    %v744 = vunpack.c.l.b16 %v187
    %v745 = vunpack.c.l.b16 %v188
    %v746 = vunpack.c.l.b16 %v189
    %v747 = vunpack.c.l.b16 %v190
    %v748 = vunpack.c.l.b16 %v191
    %v749 = vunpack.c.l.b16 %v192
    %v750 = vunpack.c.l.b16 %v193
    %v751 = vunpack.c.l.b16 %v194
    %v752 = vunpack.c.l.b16 %v195
    %v753 = vunpack.c.l.b16 %v196
    %v754 = vunpack.c.l.b16 %v197
    %v755 = vunpack.c.l.b16 %v198
    %v756 = vunpack.c.l.b16 %v199
    %v757 = vunpack.c.l.b16 %v200
    %v758 = vunpack.c.l.b16 %v201
    %v759 = vunpack.c.l.b16 %v202
    %v760 = vunpack.c.l.b16 %v203
    %v761 = vunpack.c.l.b16 %v204
    %v762 = vunpack.c.l.b16 %v205
    %v763 = vunpack.c.l.b16 %v206
    %v764 = vunpack.c.l.b16 %v207
    %v765 = vunpack.c.l.b16 %v208
    %v766 = vunpack.c.l.b16 %v209
    %v767 = vunpack.c.l.b16 %v210
    %v768 = vunpack.c.l.b16 %v211
    %v769 = vunpack.c.l.b16 %v212
    %v770 = vunpack.c.l.b16 %v213
    %v771 = vunpack.c.l.b16 %v214
    %v772 = vunpack.c.l.b16 %v215
    %v773 = vunpack.c.l.b16 %v216
    %v774 = vunpack.c.l.b16 %v217
    %v775 = vunpack.c.l.b16 %v218
    %v776 = vunpack.c.l.b16 %v219
    %v777 = vunpack.c.l.b16 %v220
    %v778 = vunpack.c.l.b16 %v221
    %v779 = vunpack.c.l.b16 %v222
    %v780 = vunpack.c.l.b16 %v223
    %v781 = vunpack.c.l.b16 %v224
    %v782 = vunpack.c.l.b16 %v225
    %v783 = vunpack.c.l.b16 %v226
    %v784 = vunpack.c.l.b16 %v227
    %v785 = vunpack.c.l.b16 %v228
    %v786 = vunpack.c.l.b16 %v229
    %v787 = vunpack.c.l.b16 %v230
    %v788 = vunpack.c.l.b16 %v231
    %v789 = vunpack.c.l.b16 %v232
    %v790 = vunpack.c.l.b16 %v233
    %v791 = vunpack.c.l.b16 %v234
    %v792 = vunpack.c.l.b16 %v235
    %v793 = vunpack.c.l.b16 %v236
    %v794 = vunpack.c.l.b16 %v237
    %v795 = vunpack.c.l.b16 %v238
    %v796 = vunpack.c.l.b16 %v239
    %v797 = vunpack.c.l.b16 %v240
    %v798 = vunpack.c.l.b16 %v241
    %v799 = vunpack.c.l.b16 %v242
    %v800 = vunpack.c.l.b16 %v243
    %v801 = vunpack.c.l.b16 %v244
    %v802 = vunpack.c.l.b16 %v245
    %v803 = vunpack.c.l.b16 %v246
    %v804 = vunpack.c.l.b16 %v247
    %v805 = vunpack.c.l.b16 %v248
    %v806 = vunpack.c.l.b16 %v249
    %v807 = vunpack.c.l.b16 %v250
    %v808 = vpack.c.b16 %v681, %v680
    %v809 = vpack.c.b16 %v683, %v682
    %v810 = vpack.c.b16 %v685, %v684
    %v811 = vpack.c.b16 %v687, %v686
    %v812 = vpack.c.b16 %v689, %v688
    %v813 = vpack.c.b16 %v691, %v690
    %v814 = vpack.c.b16 %v693, %v692
    %v815 = vpack.c.b16 %v695, %v694
    %v816 = vpack.c.b16 %v697, %v696
    %v817 = vpack.c.b16 %v699, %v698
    %v818 = vpack.c.b16 %v701, %v700
    %v819 = vpack.c.b16 %v703, %v702
    %v820 = vpack.c.b16 %v705, %v704
    %v821 = vpack.c.b16 %v707, %v706
    %v822 = vpack.c.b16 %v709, %v708
    %v823 = vpack.c.b16 %v711, %v710
    %v824 = vpack.c.b16 %v713, %v712
    %v825 = vpack.c.b16 %v715, %v714
    %v826 = vpack.c.b16 %v717, %v716
    %v827 = vpack.c.b16 %v719, %v718
    %v828 = vpack.c.b16 %v721, %v720
    %v829 = vpack.c.b16 %v723, %v722
    %v830 = vpack.c.b16 %v725, %v724
    %v831 = vpack.c.b16 %v727, %v726
    %v832 = vpack.c.b16 %v729, %v728
    %v833 = vpack.c.b16 %v731, %v730
    %v834 = vpack.c.b16 %v733, %v732
    %v835 = vpack.c.b16 %v735, %v734
    %v836 = vpack.c.b16 %v737, %v736
    %v837 = vpack.c.b16 %v739, %v738
    %v838 = vpack.c.b16 %v741, %v740
    %v839 = vpack.c.b16 %v743, %v742
    %v840 = vpack.c.b16 %v745, %v744
    %v841 = vpack.c.b16 %v747, %v746
    %v842 = vpack.c.b16 %v749, %v748
    %v843 = vpack.c.b16 %v751, %v750
    %v844 = vpack.c.b16 %v753, %v752
    %v845 = vpack.c.b16 %v755, %v754
    %v846 = vpack.c.b16 %v757, %v756
    %v847 = vpack.c.b16 %v759, %v758
    %v848 = vpack.c.b16 %v761, %v760
    %v849 = vpack.c.b16 %v763, %v762
    %v850 = vpack.c.b16 %v765, %v764
    %v851 = vpack.c.b16 %v767, %v766
    %v852 = vpack.c.b16 %v769, %v768
    %v853 = vpack.c.b16 %v771, %v770
    %v854 = vpack.c.b16 %v773, %v772
    %v855 = vpack.c.b16 %v775, %v774
    %v856 = vpack.c.b16 %v777, %v776
    %v857 = vpack.c.b16 %v779, %v778
    %v858 = vpack.c.b16 %v781, %v780
    %v859 = vpack.c.b16 %v783, %v782
    %v860 = vpack.c.b16 %v785, %v784
    %v861 = vpack.c.b16 %v787, %v786
    %v862 = vpack.c.b16 %v789, %v788
    %v863 = vpack.c.b16 %v791, %v790
    %v864 = vpack.c.b16 %v793, %v792
    %v865 = vpack.c.b16 %v795, %v794
    %v866 = vpack.c.b16 %v797, %v796
    %v867 = vpack.c.b16 %v799, %v798
    %v868 = vpack.c.b16 %v801, %v800
    %v869 = vpack.c.b16 %v803, %v802
    %v870 = vpack.c.b16 %v805, %v804
    %v871 = vpack.c.b16 %v807, %v806
    %936 = vmatprep.subr.bf16.mxu0 0
    %937 = vmatpush1.bf16.msra.mxu0 %v815
    %938 = vmatprep.subr.bf16.mxu0 0
    %939 = vmatpush1.bf16.msra.mxu0 %v814
    %940 = vmatprep.subr.bf16.mxu0 0
    %941 = vmatpush1.bf16.msra.mxu0 %v813
    %942 = vmatprep.subr.bf16.mxu0 0
    %943 = vmatpush1.bf16.msra.mxu0 %v812
    %944 = vmatprep.subr.bf16.mxu0 0
    %945 = vmatpush1.bf16.msra.mxu0 %v811
    %946 = vmatprep.subr.bf16.mxu0 0
    %947 = vmatpush1.bf16.msra.mxu0 %v810
    %948 = vmatprep.subr.bf16.mxu0 0
    %949 = vmatpush1.bf16.msra.mxu0 %v809
    %950 = vmatprep.subr.bf16.mxu0 0
    %951 = vmatpush1.bf16.msra.mxu0 %v808
    %952 = vmatprep.subr.bf16.mxu0 0
    %953 = vmatpush2.bf16.msra.mxu0 %v823
    %954 = vmatprep.subr.bf16.mxu0 0
    %955 = vmatpush2.bf16.msra.mxu0 %v822
    %956 = vmatprep.subr.bf16.mxu0 0
    %957 = vmatpush2.bf16.msra.mxu0 %v821
    %958 = vmatprep.subr.bf16.mxu0 0
    %959 = vmatpush2.bf16.msra.mxu0 %v820
    %960 = vmatprep.subr.bf16.mxu0 0
    %961 = vmatpush2.bf16.msra.mxu0 %v819
    %962 = vmatprep.subr.bf16.mxu0 0
    %963 = vmatpush2.bf16.msra.mxu0 %v818
    %964 = vmatprep.subr.bf16.mxu0 0
    %965 = vmatpush2.bf16.msra.mxu0 %v817
    %966 = vmatprep.subr.bf16.mxu0 0
    %967 = vmatpush2.bf16.msra.mxu0 %v816
    %968 = vmatprep.mubr.bf16.mxu0 %v537
    %969 = vmatmul.mubr.bf16.gmra.mxu0 %v536
    %v970 = vpop.f32.mrf.mxu0
    %v971 = vadd.f32 0.0, %v970
    %v972 = vpop.f32.mrf.mxu0
    %v973 = vpop.f32.mrf.mxu0
    %v974 = vadd.f32 0.0, %v973
    %v975 = vpop.f32.mrf.mxu0
    %976 = vdwg.mxu0
    %977 = vmatprep.subr.bf16.mxu0 0
    %978 = vmatpush1.bf16.msra.mxu0 %v831
    %979 = vmatprep.subr.bf16.mxu0 0
    %980 = vmatpush1.bf16.msra.mxu0 %v830
    %981 = vmatprep.subr.bf16.mxu0 0
    %982 = vmatpush1.bf16.msra.mxu0 %v829
    %983 = vmatprep.subr.bf16.mxu0 0
    %984 = vmatpush1.bf16.msra.mxu0 %v828
    %985 = vmatprep.subr.bf16.mxu0 0
    %986 = vmatpush1.bf16.msra.mxu0 %v827
    %987 = vmatprep.subr.bf16.mxu0 0
    %988 = vmatpush1.bf16.msra.mxu0 %v826
    %989 = vmatprep.subr.bf16.mxu0 0
    %990 = vmatpush1.bf16.msra.mxu0 %v825
    %991 = vmatprep.subr.bf16.mxu0 0
    %992 = vmatpush1.bf16.msra.mxu0 %v824
    %993 = vmatprep.subr.bf16.mxu0 0
    %994 = vmatpush2.bf16.msra.mxu0 %v839
    %995 = vmatprep.subr.bf16.mxu0 0
    %996 = vmatpush2.bf16.msra.mxu0 %v838
    %997 = vmatprep.subr.bf16.mxu0 0
    %998 = vmatpush2.bf16.msra.mxu0 %v837
    %999 = vmatprep.subr.bf16.mxu0 0
    %1000 = vmatpush2.bf16.msra.mxu0 %v836
    %1001 = vmatprep.subr.bf16.mxu0 0
    %1002 = vmatpush2.bf16.msra.mxu0 %v835
    %1003 = vmatprep.subr.bf16.mxu0 0
    %1004 = vmatpush2.bf16.msra.mxu0 %v834
    %1005 = vmatprep.subr.bf16.mxu0 0
    %1006 = vmatpush2.bf16.msra.mxu0 %v833
    %1007 = vmatprep.subr.bf16.mxu0 0
    %1008 = vmatpush2.bf16.msra.mxu0 %v832
    %1009 = vmatprep.mubr.bf16.mxu0 %v539
    %1010 = vmatmul.mubr.bf16.gmra.mxu0 %v538
    %v1011 = vpop.f32.mrf.mxu0
    %v1012 = vadd.f32 %v971, %v1011
    %v1013 = vpop.f32.mrf.mxu0
    %v1014 = vpop.f32.mrf.mxu0
    %v1015 = vadd.f32 %v974, %v1014
    %v1016 = vpop.f32.mrf.mxu0
    %1017 = vdwg.mxu0
    %1018 = vmatprep.subr.bf16.mxu0 0
    %1019 = vmatpush1.bf16.msra.mxu0 %v847
    %1020 = vmatprep.subr.bf16.mxu0 0
    %1021 = vmatpush1.bf16.msra.mxu0 %v846
    %1022 = vmatprep.subr.bf16.mxu0 0
    %1023 = vmatpush1.bf16.msra.mxu0 %v845
    %1024 = vmatprep.subr.bf16.mxu0 0
    %1025 = vmatpush1.bf16.msra.mxu0 %v844
    %1026 = vmatprep.subr.bf16.mxu0 0
    %1027 = vmatpush1.bf16.msra.mxu0 %v843
    %1028 = vmatprep.subr.bf16.mxu0 0
    %1029 = vmatpush1.bf16.msra.mxu0 %v842
    %1030 = vmatprep.subr.bf16.mxu0 0
    %1031 = vmatpush1.bf16.msra.mxu0 %v841
    %1032 = vmatprep.subr.bf16.mxu0 0
    %1033 = vmatpush1.bf16.msra.mxu0 %v840
    %1034 = vmatprep.subr.bf16.mxu0 0
    %1035 = vmatpush2.bf16.msra.mxu0 %v855
    %1036 = vmatprep.subr.bf16.mxu0 0
    %1037 = vmatpush2.bf16.msra.mxu0 %v854
    %1038 = vmatprep.subr.bf16.mxu0 0
    %1039 = vmatpush2.bf16.msra.mxu0 %v853
    %1040 = vmatprep.subr.bf16.mxu0 0
    %1041 = vmatpush2.bf16.msra.mxu0 %v852
    %1042 = vmatprep.subr.bf16.mxu0 0
    %1043 = vmatpush2.bf16.msra.mxu0 %v851
    %1044 = vmatprep.subr.bf16.mxu0 0
    %1045 = vmatpush2.bf16.msra.mxu0 %v850
    %1046 = vmatprep.subr.bf16.mxu0 0
    %1047 = vmatpush2.bf16.msra.mxu0 %v849
    %1048 = vmatprep.subr.bf16.mxu0 0
    %1049 = vmatpush2.bf16.msra.mxu0 %v848
    %1050 = vmatprep.mubr.bf16.mxu0 %v541
    %1051 = vmatmul.mubr.bf16.gmra.mxu0 %v540
    %v1052 = vpop.f32.mrf.mxu0
    %v1053 = vadd.f32 %v1012, %v1052
    %v1054 = vpop.f32.mrf.mxu0
    %v1055 = vpop.f32.mrf.mxu0
    %v1056 = vadd.f32 %v1015, %v1055
    %v1057 = vpop.f32.mrf.mxu0
    %1058 = vdwg.mxu0
    %1059 = vmatprep.subr.bf16.mxu0 0
    %1060 = vmatpush1.bf16.msra.mxu0 %v863
    %1061 = vmatprep.subr.bf16.mxu0 0
    %1062 = vmatpush1.bf16.msra.mxu0 %v862
    %1063 = vmatprep.subr.bf16.mxu0 0
    %1064 = vmatpush1.bf16.msra.mxu0 %v861
    %1065 = vmatprep.subr.bf16.mxu0 0
    %1066 = vmatpush1.bf16.msra.mxu0 %v860
    %1067 = vmatprep.subr.bf16.mxu0 0
    %1068 = vmatpush1.bf16.msra.mxu0 %v859
    %1069 = vmatprep.subr.bf16.mxu0 0
    %1070 = vmatpush1.bf16.msra.mxu0 %v858
    %1071 = vmatprep.subr.bf16.mxu0 0
    %1072 = vmatpush1.bf16.msra.mxu0 %v857
    %1073 = vmatprep.subr.bf16.mxu0 0
    %1074 = vmatpush1.bf16.msra.mxu0 %v856
    %1075 = vmatprep.subr.bf16.mxu0 0
    %1076 = vmatpush2.bf16.msra.mxu0 %v871
    %1077 = vmatprep.subr.bf16.mxu0 0
    %1078 = vmatpush2.bf16.msra.mxu0 %v870
    %1079 = vmatprep.subr.bf16.mxu0 0
    %1080 = vmatpush2.bf16.msra.mxu0 %v869
    %1081 = vmatprep.subr.bf16.mxu0 0
    %1082 = vmatpush2.bf16.msra.mxu0 %v868
    %1083 = vmatprep.subr.bf16.mxu0 0
    %1084 = vmatpush2.bf16.msra.mxu0 %v867
    %1085 = vmatprep.subr.bf16.mxu0 0
    %1086 = vmatpush2.bf16.msra.mxu0 %v866
    %1087 = vmatprep.subr.bf16.mxu0 0
    %1088 = vmatpush2.bf16.msra.mxu0 %v865
    %1089 = vmatprep.subr.bf16.mxu0 0
    %1090 = vmatpush2.bf16.msra.mxu0 %v864
    %1091 = vmatprep.mubr.bf16.mxu0 %v543
    %1092 = vmatmul.mubr.bf16.gmra.mxu0 %v542
    %v1093 = vpop.f32.mrf.mxu0
    %v1094 = vadd.f32 %v1053, %v1093
    %v1095 = vpop.f32.mrf.mxu0
    %v1096 = vpop.f32.mrf.mxu0
    %v1097 = vadd.f32 %v1056, %v1096
    %v1098 = vpop.f32.mrf.mxu0
    %1099 = vdwg.mxu0
    %v1100 = vadd.f32 %v510, %v1094
    %v1101 = vadd.f32 %v511, %v1097
    %1102 = vst [vmem:[#allocation2] sm:$0xff] %v1100
    %1103 = vst [vmem:[#allocation2 + $0x8] sm:$0xff] %v1101
    %v1104 = vld [vmem:[#allocation3] sm:$0xff]
    %v1105 = vld [vmem:[#allocation3 + $0x8] sm:$0xff]
    %v1106 = vld [vmem:[#allocation3 + $0x10] sm:$0xff]
    %v1107 = vld [vmem:[#allocation3 + $0x18] sm:$0xff]
    %v1108 = vld [vmem:[#allocation3 + $0x20] sm:$0xff]
    %v1109 = vld [vmem:[#allocation3 + $0x28] sm:$0xff]
    %v1110 = vld [vmem:[#allocation3 + $0x30] sm:$0xff]
    %v1111 = vld [vmem:[#allocation3 + $0x38] sm:$0xff]
    %v1120 = vunpack.c.l.b16 %v110
    %v1121 = vunpack.c.h.b16 %v110
    %v1122 = vunpack.c.l.b16 %v111
    %v1123 = vunpack.c.h.b16 %v111
    %v1124 = vunpack.c.l.b16 %v112
    %v1125 = vunpack.c.h.b16 %v112
    %v1126 = vunpack.c.l.b16 %v113
    %v1127 = vunpack.c.h.b16 %v113
    %v1128 = vunpack.c.l.b16 %v114
    %v1129 = vunpack.c.h.b16 %v114
    %v1130 = vunpack.c.l.b16 %v115
    %v1131 = vunpack.c.h.b16 %v115
    %v1132 = vunpack.c.l.b16 %v116
    %v1133 = vunpack.c.h.b16 %v116
    %v1134 = vunpack.c.l.b16 %v117
    %v1135 = vunpack.c.h.b16 %v117
    %v1136 = vpack.c.b16 %v1128, %v1120
    %v1137 = vpack.c.b16 %v1129, %v1121
    %v1138 = vpack.c.b16 %v1130, %v1122
    %v1139 = vpack.c.b16 %v1131, %v1123
    %v1140 = vpack.c.b16 %v1132, %v1124
    %v1141 = vpack.c.b16 %v1133, %v1125
    %v1142 = vpack.c.b16 %v1134, %v1126
    %v1143 = vpack.c.b16 %v1135, %v1127
    %v1408 = vunpack.c.l.b16 %v254
    %v1409 = vunpack.c.h.b16 %v254
    %v1410 = vunpack.c.l.b16 %v255
    %v1411 = vunpack.c.h.b16 %v255
    %v1412 = vunpack.c.l.b16 %v256
    %v1413 = vunpack.c.h.b16 %v256
    %v1414 = vunpack.c.l.b16 %v257
    %v1415 = vunpack.c.h.b16 %v257
    %v1416 = vunpack.c.l.b16 %v258
    %v1417 = vunpack.c.h.b16 %v258
    %v1418 = vunpack.c.l.b16 %v259
    %v1419 = vunpack.c.h.b16 %v259
    %v1420 = vunpack.c.l.b16 %v260
    %v1421 = vunpack.c.h.b16 %v260
    %v1422 = vunpack.c.l.b16 %v261
    %v1423 = vunpack.c.h.b16 %v261
    %v1424 = vunpack.c.l.b16 %v262
    %v1425 = vunpack.c.h.b16 %v262
    %v1426 = vunpack.c.l.b16 %v263
    %v1427 = vunpack.c.h.b16 %v263
    %v1428 = vunpack.c.l.b16 %v264
    %v1429 = vunpack.c.h.b16 %v264
    %v1430 = vunpack.c.l.b16 %v265
    %v1431 = vunpack.c.h.b16 %v265
    %v1432 = vunpack.c.l.b16 %v266
    %v1433 = vunpack.c.h.b16 %v266
    %v1434 = vunpack.c.l.b16 %v267
    %v1435 = vunpack.c.h.b16 %v267
    %v1436 = vunpack.c.l.b16 %v268
    %v1437 = vunpack.c.h.b16 %v268
    %v1438 = vunpack.c.l.b16 %v269
    %v1439 = vunpack.c.h.b16 %v269
    %v1440 = vunpack.c.l.b16 %v270
    %v1441 = vunpack.c.h.b16 %v270
    %v1442 = vunpack.c.l.b16 %v271
    %v1443 = vunpack.c.h.b16 %v271
    %v1444 = vunpack.c.l.b16 %v272
    %v1445 = vunpack.c.h.b16 %v272
    %v1446 = vunpack.c.l.b16 %v273
    %v1447 = vunpack.c.h.b16 %v273
    %v1448 = vunpack.c.l.b16 %v274
    %v1449 = vunpack.c.h.b16 %v274
    %v1450 = vunpack.c.l.b16 %v275
    %v1451 = vunpack.c.h.b16 %v275
    %v1452 = vunpack.c.l.b16 %v276
    %v1453 = vunpack.c.h.b16 %v276
    %v1454 = vunpack.c.l.b16 %v277
    %v1455 = vunpack.c.h.b16 %v277
    %v1456 = vunpack.c.l.b16 %v278
    %v1457 = vunpack.c.h.b16 %v278
    %v1458 = vunpack.c.l.b16 %v279
    %v1459 = vunpack.c.h.b16 %v279
    %v1460 = vunpack.c.l.b16 %v280
    %v1461 = vunpack.c.h.b16 %v280
    %v1462 = vunpack.c.l.b16 %v281
    %v1463 = vunpack.c.h.b16 %v281
    %v1464 = vunpack.c.l.b16 %v282
    %v1465 = vunpack.c.h.b16 %v282
    %v1466 = vunpack.c.l.b16 %v283
    %v1467 = vunpack.c.h.b16 %v283
    %v1468 = vunpack.c.l.b16 %v284
    %v1469 = vunpack.c.h.b16 %v284
    %v1470 = vunpack.c.l.b16 %v285
    %v1471 = vunpack.c.h.b16 %v285
    %v1472 = vunpack.c.l.b16 %v286
    %v1473 = vunpack.c.h.b16 %v286
    %v1474 = vunpack.c.l.b16 %v287
    %v1475 = vunpack.c.h.b16 %v287
    %v1476 = vunpack.c.l.b16 %v288
    %v1477 = vunpack.c.h.b16 %v288
    %v1478 = vunpack.c.l.b16 %v289
    %v1479 = vunpack.c.h.b16 %v289
    %v1480 = vunpack.c.l.b16 %v290
    %v1481 = vunpack.c.h.b16 %v290
    %v1482 = vunpack.c.l.b16 %v291
    %v1483 = vunpack.c.h.b16 %v291
    %v1484 = vunpack.c.l.b16 %v292
    %v1485 = vunpack.c.h.b16 %v292
    %v1486 = vunpack.c.l.b16 %v293
    %v1487 = vunpack.c.h.b16 %v293
    %v1488 = vunpack.c.l.b16 %v294
    %v1489 = vunpack.c.h.b16 %v294
    %v1490 = vunpack.c.l.b16 %v295
    %v1491 = vunpack.c.h.b16 %v295
    %v1492 = vunpack.c.l.b16 %v296
    %v1493 = vunpack.c.h.b16 %v296
    %v1494 = vunpack.c.l.b16 %v297
    %v1495 = vunpack.c.h.b16 %v297
    %v1496 = vunpack.c.l.b16 %v298
    %v1497 = vunpack.c.h.b16 %v298
    %v1498 = vunpack.c.l.b16 %v299
    %v1499 = vunpack.c.h.b16 %v299
    %v1500 = vunpack.c.l.b16 %v300
    %v1501 = vunpack.c.h.b16 %v300
    %v1502 = vunpack.c.l.b16 %v301
    %v1503 = vunpack.c.h.b16 %v301
    %v1504 = vunpack.c.l.b16 %v302
    %v1505 = vunpack.c.h.b16 %v302
    %v1506 = vunpack.c.l.b16 %v303
    %v1507 = vunpack.c.h.b16 %v303
    %v1508 = vunpack.c.l.b16 %v304
    %v1509 = vunpack.c.h.b16 %v304
    %v1510 = vunpack.c.l.b16 %v305
    %v1511 = vunpack.c.h.b16 %v305
    %v1512 = vunpack.c.l.b16 %v306
    %v1513 = vunpack.c.h.b16 %v306
    %v1514 = vunpack.c.l.b16 %v307
    %v1515 = vunpack.c.h.b16 %v307
    %v1516 = vunpack.c.l.b16 %v308
    %v1517 = vunpack.c.h.b16 %v308
    %v1518 = vunpack.c.l.b16 %v309
    %v1519 = vunpack.c.h.b16 %v309
    %v1520 = vunpack.c.l.b16 %v310
    %v1521 = vunpack.c.h.b16 %v310
    %v1522 = vunpack.c.l.b16 %v311
    %v1523 = vunpack.c.h.b16 %v311
    %v1524 = vunpack.c.l.b16 %v312
    %v1525 = vunpack.c.h.b16 %v312
    %v1526 = vunpack.c.l.b16 %v313
    %v1527 = vunpack.c.h.b16 %v313
    %v1528 = vunpack.c.l.b16 %v314
    %v1529 = vunpack.c.h.b16 %v314
    %v1530 = vunpack.c.l.b16 %v315
    %v1531 = vunpack.c.h.b16 %v315
    %v1532 = vunpack.c.l.b16 %v316
    %v1533 = vunpack.c.h.b16 %v316
    %v1534 = vunpack.c.l.b16 %v317
    %v1535 = vunpack.c.h.b16 %v317
    %v1536 = vunpack.c.l.b16 %v318
    %v1537 = vunpack.c.h.b16 %v318
    %v1538 = vunpack.c.l.b16 %v319
    %v1539 = vunpack.c.h.b16 %v319
    %v1540 = vunpack.c.l.b16 %v320
    %v1541 = vunpack.c.h.b16 %v320
    %v1542 = vunpack.c.l.b16 %v321
    %v1543 = vunpack.c.h.b16 %v321
    %v1544 = vunpack.c.l.b16 %v322
    %v1545 = vunpack.c.h.b16 %v322
    %v1546 = vunpack.c.l.b16 %v323
    %v1547 = vunpack.c.h.b16 %v323
    %v1548 = vunpack.c.l.b16 %v324
    %v1549 = vunpack.c.h.b16 %v324
    %v1550 = vunpack.c.l.b16 %v325
    %v1551 = vunpack.c.h.b16 %v325
    %v1552 = vunpack.c.l.b16 %v326
    %v1553 = vunpack.c.h.b16 %v326
    %v1554 = vunpack.c.l.b16 %v327
    %v1555 = vunpack.c.h.b16 %v327
    %v1556 = vunpack.c.l.b16 %v328
    %v1557 = vunpack.c.h.b16 %v328
    %v1558 = vunpack.c.l.b16 %v329
    %v1559 = vunpack.c.h.b16 %v329
    %v1560 = vunpack.c.l.b16 %v330
    %v1561 = vunpack.c.h.b16 %v330
    %v1562 = vunpack.c.l.b16 %v331
    %v1563 = vunpack.c.h.b16 %v331
    %v1564 = vunpack.c.l.b16 %v332
    %v1565 = vunpack.c.h.b16 %v332
    %v1566 = vunpack.c.l.b16 %v333
    %v1567 = vunpack.c.h.b16 %v333
    %v1568 = vunpack.c.l.b16 %v334
    %v1569 = vunpack.c.h.b16 %v334
    %v1570 = vunpack.c.l.b16 %v335
    %v1571 = vunpack.c.h.b16 %v335
    %v1572 = vunpack.c.l.b16 %v336
    %v1573 = vunpack.c.h.b16 %v336
    %v1574 = vunpack.c.l.b16 %v337
    %v1575 = vunpack.c.h.b16 %v337
    %v1576 = vunpack.c.l.b16 %v338
    %v1577 = vunpack.c.h.b16 %v338
    %v1578 = vunpack.c.l.b16 %v339
    %v1579 = vunpack.c.h.b16 %v339
    %v1580 = vunpack.c.l.b16 %v340
    %v1581 = vunpack.c.h.b16 %v340
    %v1582 = vunpack.c.l.b16 %v341
    %v1583 = vunpack.c.h.b16 %v341
    %v1584 = vunpack.c.l.b16 %v342
    %v1585 = vunpack.c.h.b16 %v342
    %v1586 = vunpack.c.l.b16 %v343
    %v1587 = vunpack.c.h.b16 %v343
    %v1588 = vunpack.c.l.b16 %v344
    %v1589 = vunpack.c.h.b16 %v344
    %v1590 = vunpack.c.l.b16 %v345
    %v1591 = vunpack.c.h.b16 %v345
    %v1592 = vunpack.c.l.b16 %v346
    %v1593 = vunpack.c.h.b16 %v346
    %v1594 = vunpack.c.l.b16 %v347
    %v1595 = vunpack.c.h.b16 %v347
    %v1596 = vunpack.c.l.b16 %v348
    %v1597 = vunpack.c.h.b16 %v348
    %v1598 = vunpack.c.l.b16 %v349
    %v1599 = vunpack.c.h.b16 %v349
    %v1600 = vunpack.c.l.b16 %v350
    %v1601 = vunpack.c.h.b16 %v350
    %v1602 = vunpack.c.l.b16 %v351
    %v1603 = vunpack.c.h.b16 %v351
    %v1604 = vunpack.c.l.b16 %v352
    %v1605 = vunpack.c.h.b16 %v352
    %v1606 = vunpack.c.l.b16 %v353
    %v1607 = vunpack.c.h.b16 %v353
    %v1608 = vunpack.c.l.b16 %v354
    %v1609 = vunpack.c.h.b16 %v354
    %v1610 = vunpack.c.l.b16 %v355
    %v1611 = vunpack.c.h.b16 %v355
    %v1612 = vunpack.c.l.b16 %v356
    %v1613 = vunpack.c.h.b16 %v356
    %v1614 = vunpack.c.l.b16 %v357
    %v1615 = vunpack.c.h.b16 %v357
    %v1616 = vunpack.c.l.b16 %v358
    %v1617 = vunpack.c.h.b16 %v358
    %v1618 = vunpack.c.l.b16 %v359
    %v1619 = vunpack.c.h.b16 %v359
    %v1620 = vunpack.c.l.b16 %v360
    %v1621 = vunpack.c.h.b16 %v360
    %v1622 = vunpack.c.l.b16 %v361
    %v1623 = vunpack.c.h.b16 %v361
    %v1624 = vunpack.c.l.b16 %v362
    %v1625 = vunpack.c.h.b16 %v362
    %v1626 = vunpack.c.l.b16 %v363
    %v1627 = vunpack.c.h.b16 %v363
    %v1628 = vunpack.c.l.b16 %v364
    %v1629 = vunpack.c.h.b16 %v364
    %v1630 = vunpack.c.l.b16 %v365
    %v1631 = vunpack.c.h.b16 %v365
    %v1632 = vunpack.c.l.b16 %v366
    %v1633 = vunpack.c.h.b16 %v366
    %v1634 = vunpack.c.l.b16 %v367
    %v1635 = vunpack.c.h.b16 %v367
    %v1636 = vunpack.c.l.b16 %v368
    %v1637 = vunpack.c.h.b16 %v368
    %v1638 = vunpack.c.l.b16 %v369
    %v1639 = vunpack.c.h.b16 %v369
    %v1640 = vunpack.c.l.b16 %v370
    %v1641 = vunpack.c.h.b16 %v370
    %v1642 = vunpack.c.l.b16 %v371
    %v1643 = vunpack.c.h.b16 %v371
    %v1644 = vunpack.c.l.b16 %v372
    %v1645 = vunpack.c.h.b16 %v372
    %v1646 = vunpack.c.l.b16 %v373
    %v1647 = vunpack.c.h.b16 %v373
    %v1648 = vunpack.c.l.b16 %v374
    %v1649 = vunpack.c.h.b16 %v374
    %v1650 = vunpack.c.l.b16 %v375
    %v1651 = vunpack.c.h.b16 %v375
    %v1652 = vunpack.c.l.b16 %v376
    %v1653 = vunpack.c.h.b16 %v376
    %v1654 = vunpack.c.l.b16 %v377
    %v1655 = vunpack.c.h.b16 %v377
    %v1656 = vunpack.c.l.b16 %v378
    %v1657 = vunpack.c.h.b16 %v378
    %v1658 = vunpack.c.l.b16 %v379
    %v1659 = vunpack.c.h.b16 %v379
    %v1660 = vunpack.c.l.b16 %v380
    %v1661 = vunpack.c.h.b16 %v380
    %v1662 = vunpack.c.l.b16 %v381
    %v1663 = vunpack.c.h.b16 %v381
    %v1664 = vunpack.c.l.b16 %v382
    %v1665 = vunpack.c.h.b16 %v382
    %v1666 = vunpack.c.l.b16 %v383
    %v1667 = vunpack.c.h.b16 %v383
    %v1668 = vunpack.c.l.b16 %v384
    %v1669 = vunpack.c.h.b16 %v384
    %v1670 = vunpack.c.l.b16 %v385
    %v1671 = vunpack.c.h.b16 %v385
    %v1672 = vunpack.c.l.b16 %v386
    %v1673 = vunpack.c.h.b16 %v386
    %v1674 = vunpack.c.l.b16 %v387
    %v1675 = vunpack.c.h.b16 %v387
    %v1676 = vunpack.c.l.b16 %v388
    %v1677 = vunpack.c.h.b16 %v388
    %v1678 = vunpack.c.l.b16 %v389
    %v1679 = vunpack.c.h.b16 %v389
    %v1680 = vunpack.c.l.b16 %v390
    %v1681 = vunpack.c.h.b16 %v390
    %v1682 = vunpack.c.l.b16 %v391
    %v1683 = vunpack.c.h.b16 %v391
    %v1684 = vunpack.c.l.b16 %v392
    %v1685 = vunpack.c.h.b16 %v392
    %v1686 = vunpack.c.l.b16 %v393
    %v1687 = vunpack.c.h.b16 %v393
    %v1688 = vunpack.c.l.b16 %v394
    %v1689 = vunpack.c.h.b16 %v394
    %v1690 = vunpack.c.l.b16 %v395
    %v1691 = vunpack.c.h.b16 %v395
    %v1692 = vunpack.c.l.b16 %v396
    %v1693 = vunpack.c.h.b16 %v396
    %v1694 = vunpack.c.l.b16 %v397
    %v1695 = vunpack.c.h.b16 %v397
    %v1696 = vunpack.c.l.b16 %v398
    %v1697 = vunpack.c.h.b16 %v398
    %v1698 = vunpack.c.l.b16 %v399
    %v1699 = vunpack.c.h.b16 %v399
    %v1700 = vunpack.c.l.b16 %v400
    %v1701 = vunpack.c.h.b16 %v400
    %v1702 = vunpack.c.l.b16 %v401
    %v1703 = vunpack.c.h.b16 %v401
    %v1704 = vunpack.c.l.b16 %v402
    %v1705 = vunpack.c.h.b16 %v402
    %v1706 = vunpack.c.l.b16 %v403
    %v1707 = vunpack.c.h.b16 %v403
    %v1708 = vunpack.c.l.b16 %v404
    %v1709 = vunpack.c.h.b16 %v404
    %v1710 = vunpack.c.l.b16 %v405
    %v1711 = vunpack.c.h.b16 %v405
    %v1712 = vunpack.c.l.b16 %v406
    %v1713 = vunpack.c.h.b16 %v406
    %v1714 = vunpack.c.l.b16 %v407
    %v1715 = vunpack.c.h.b16 %v407
    %v1716 = vunpack.c.l.b16 %v408
    %v1717 = vunpack.c.h.b16 %v408
    %v1718 = vunpack.c.l.b16 %v409
    %v1719 = vunpack.c.h.b16 %v409
    %v1720 = vunpack.c.l.b16 %v410
    %v1721 = vunpack.c.h.b16 %v410
    %v1722 = vunpack.c.l.b16 %v411
    %v1723 = vunpack.c.h.b16 %v411
    %v1724 = vunpack.c.l.b16 %v412
    %v1725 = vunpack.c.h.b16 %v412
    %v1726 = vunpack.c.l.b16 %v413
    %v1727 = vunpack.c.h.b16 %v413
    %v1728 = vunpack.c.l.b16 %v414
    %v1729 = vunpack.c.h.b16 %v414
    %v1730 = vunpack.c.l.b16 %v415
    %v1731 = vunpack.c.h.b16 %v415
    %v1732 = vunpack.c.l.b16 %v416
    %v1733 = vunpack.c.h.b16 %v416
    %v1734 = vunpack.c.l.b16 %v417
    %v1735 = vunpack.c.h.b16 %v417
    %v1736 = vunpack.c.l.b16 %v418
    %v1737 = vunpack.c.h.b16 %v418
    %v1738 = vunpack.c.l.b16 %v419
    %v1739 = vunpack.c.h.b16 %v419
    %v1740 = vunpack.c.l.b16 %v420
    %v1741 = vunpack.c.h.b16 %v420
    %v1742 = vunpack.c.l.b16 %v421
    %v1743 = vunpack.c.h.b16 %v421
    %v1744 = vunpack.c.l.b16 %v422
    %v1745 = vunpack.c.h.b16 %v422
    %v1746 = vunpack.c.l.b16 %v423
    %v1747 = vunpack.c.h.b16 %v423
    %v1748 = vunpack.c.l.b16 %v424
    %v1749 = vunpack.c.h.b16 %v424
    %v1750 = vunpack.c.l.b16 %v425
    %v1751 = vunpack.c.h.b16 %v425
    %v1752 = vunpack.c.l.b16 %v426
    %v1753 = vunpack.c.h.b16 %v426
    %v1754 = vunpack.c.l.b16 %v427
    %v1755 = vunpack.c.h.b16 %v427
    %v1756 = vunpack.c.l.b16 %v428
    %v1757 = vunpack.c.h.b16 %v428
    %v1758 = vunpack.c.l.b16 %v429
    %v1759 = vunpack.c.h.b16 %v429
    %v1760 = vunpack.c.l.b16 %v430
    %v1761 = vunpack.c.h.b16 %v430
    %v1762 = vunpack.c.l.b16 %v431
    %v1763 = vunpack.c.h.b16 %v431
    %v1764 = vunpack.c.l.b16 %v432
    %v1765 = vunpack.c.h.b16 %v432
    %v1766 = vunpack.c.l.b16 %v433
    %v1767 = vunpack.c.h.b16 %v433
    %v1768 = vunpack.c.l.b16 %v434
    %v1769 = vunpack.c.h.b16 %v434
    %v1770 = vunpack.c.l.b16 %v435
    %v1771 = vunpack.c.h.b16 %v435
    %v1772 = vunpack.c.l.b16 %v436
    %v1773 = vunpack.c.h.b16 %v436
    %v1774 = vunpack.c.l.b16 %v437
    %v1775 = vunpack.c.h.b16 %v437
    %v1776 = vunpack.c.l.b16 %v438
    %v1777 = vunpack.c.h.b16 %v438
    %v1778 = vunpack.c.l.b16 %v439
    %v1779 = vunpack.c.h.b16 %v439
    %v1780 = vunpack.c.l.b16 %v440
    %v1781 = vunpack.c.h.b16 %v440
    %v1782 = vunpack.c.l.b16 %v441
    %v1783 = vunpack.c.h.b16 %v441
    %v1784 = vunpack.c.l.b16 %v442
    %v1785 = vunpack.c.h.b16 %v442
    %v1786 = vunpack.c.l.b16 %v443
    %v1787 = vunpack.c.h.b16 %v443
    %v1788 = vunpack.c.l.b16 %v444
    %v1789 = vunpack.c.h.b16 %v444
    %v1790 = vunpack.c.l.b16 %v445
    %v1791 = vunpack.c.h.b16 %v445
    %v1792 = vunpack.c.l.b16 %v446
    %v1793 = vunpack.c.h.b16 %v446
    %v1794 = vunpack.c.l.b16 %v447
    %v1795 = vunpack.c.h.b16 %v447
    %v1796 = vunpack.c.l.b16 %v448
    %v1797 = vunpack.c.h.b16 %v448
    %v1798 = vunpack.c.l.b16 %v449
    %v1799 = vunpack.c.h.b16 %v449
    %v1800 = vunpack.c.l.b16 %v450
    %v1801 = vunpack.c.h.b16 %v450
    %v1802 = vunpack.c.l.b16 %v451
    %v1803 = vunpack.c.h.b16 %v451
    %v1804 = vunpack.c.l.b16 %v452
    %v1805 = vunpack.c.h.b16 %v452
    %v1806 = vunpack.c.l.b16 %v453
    %v1807 = vunpack.c.h.b16 %v453
    %v1808 = vunpack.c.l.b16 %v454
    %v1809 = vunpack.c.h.b16 %v454
    %v1810 = vunpack.c.l.b16 %v455
    %v1811 = vunpack.c.h.b16 %v455
    %v1812 = vunpack.c.l.b16 %v456
    %v1813 = vunpack.c.h.b16 %v456
    %v1814 = vunpack.c.l.b16 %v457
    %v1815 = vunpack.c.h.b16 %v457
    %v1816 = vunpack.c.l.b16 %v458
    %v1817 = vunpack.c.h.b16 %v458
    %v1818 = vunpack.c.l.b16 %v459
    %v1819 = vunpack.c.h.b16 %v459
    %v1820 = vunpack.c.l.b16 %v460
    %v1821 = vunpack.c.h.b16 %v460
    %v1822 = vunpack.c.l.b16 %v461
    %v1823 = vunpack.c.h.b16 %v461
    %v1824 = vunpack.c.l.b16 %v462
    %v1825 = vunpack.c.h.b16 %v462
    %v1826 = vunpack.c.l.b16 %v463
    %v1827 = vunpack.c.h.b16 %v463
    %v1828 = vunpack.c.l.b16 %v464
    %v1829 = vunpack.c.h.b16 %v464
    %v1830 = vunpack.c.l.b16 %v465
    %v1831 = vunpack.c.h.b16 %v465
    %v1832 = vunpack.c.l.b16 %v466
    %v1833 = vunpack.c.h.b16 %v466
    %v1834 = vunpack.c.l.b16 %v467
    %v1835 = vunpack.c.h.b16 %v467
    %v1836 = vunpack.c.l.b16 %v468
    %v1837 = vunpack.c.h.b16 %v468
    %v1838 = vunpack.c.l.b16 %v469
    %v1839 = vunpack.c.h.b16 %v469
    %v1840 = vunpack.c.l.b16 %v470
    %v1841 = vunpack.c.h.b16 %v470
    %v1842 = vunpack.c.l.b16 %v471
    %v1843 = vunpack.c.h.b16 %v471
    %v1844 = vunpack.c.l.b16 %v472
    %v1845 = vunpack.c.h.b16 %v472
    %v1846 = vunpack.c.l.b16 %v473
    %v1847 = vunpack.c.h.b16 %v473
    %v1848 = vunpack.c.l.b16 %v474
    %v1849 = vunpack.c.h.b16 %v474
    %v1850 = vunpack.c.l.b16 %v475
    %v1851 = vunpack.c.h.b16 %v475
    %v1852 = vunpack.c.l.b16 %v476
    %v1853 = vunpack.c.h.b16 %v476
    %v1854 = vunpack.c.l.b16 %v477
    %v1855 = vunpack.c.h.b16 %v477
    %v1856 = vunpack.c.l.b16 %v478
    %v1857 = vunpack.c.h.b16 %v478
    %v1858 = vunpack.c.l.b16 %v479
    %v1859 = vunpack.c.h.b16 %v479
    %v1860 = vunpack.c.l.b16 %v480
    %v1861 = vunpack.c.h.b16 %v480
    %v1862 = vunpack.c.l.b16 %v481
    %v1863 = vunpack.c.h.b16 %v481
    %v1864 = vunpack.c.l.b16 %v482
    %v1865 = vunpack.c.h.b16 %v482
    %v1866 = vunpack.c.l.b16 %v483
    %v1867 = vunpack.c.h.b16 %v483
    %v1868 = vunpack.c.l.b16 %v484
    %v1869 = vunpack.c.h.b16 %v484
    %v1870 = vunpack.c.l.b16 %v485
    %v1871 = vunpack.c.h.b16 %v485
    %v1872 = vunpack.c.l.b16 %v486
    %v1873 = vunpack.c.h.b16 %v486
    %v1874 = vunpack.c.l.b16 %v487
    %v1875 = vunpack.c.h.b16 %v487
    %v1876 = vunpack.c.l.b16 %v488
    %v1877 = vunpack.c.h.b16 %v488
    %v1878 = vunpack.c.l.b16 %v489
    %v1879 = vunpack.c.h.b16 %v489
    %v1880 = vunpack.c.l.b16 %v490
    %v1881 = vunpack.c.h.b16 %v490
    %v1882 = vunpack.c.l.b16 %v491
    %v1883 = vunpack.c.h.b16 %v491
    %v1884 = vunpack.c.l.b16 %v492
    %v1885 = vunpack.c.h.b16 %v492
    %v1886 = vunpack.c.l.b16 %v493
    %v1887 = vunpack.c.h.b16 %v493
    %v1888 = vunpack.c.l.b16 %v494
    %v1889 = vunpack.c.h.b16 %v494
    %v1890 = vunpack.c.l.b16 %v495
    %v1891 = vunpack.c.h.b16 %v495
    %v1892 = vunpack.c.l.b16 %v496
    %v1893 = vunpack.c.h.b16 %v496
    %v1894 = vunpack.c.l.b16 %v497
    %v1895 = vunpack.c.h.b16 %v497
    %v1896 = vunpack.c.l.b16 %v498
    %v1897 = vunpack.c.h.b16 %v498
    %v1898 = vunpack.c.l.b16 %v499
    %v1899 = vunpack.c.h.b16 %v499
    %v1900 = vunpack.c.l.b16 %v500
    %v1901 = vunpack.c.h.b16 %v500
    %v1902 = vunpack.c.l.b16 %v501
    %v1903 = vunpack.c.h.b16 %v501
    %v1904 = vunpack.c.l.b16 %v502
    %v1905 = vunpack.c.h.b16 %v502
    %v1906 = vunpack.c.l.b16 %v503
    %v1907 = vunpack.c.h.b16 %v503
    %v1908 = vunpack.c.l.b16 %v504
    %v1909 = vunpack.c.h.b16 %v504
    %v1910 = vunpack.c.l.b16 %v505
    %v1911 = vunpack.c.h.b16 %v505
    %v1912 = vunpack.c.l.b16 %v506
    %v1913 = vunpack.c.h.b16 %v506
    %v1914 = vunpack.c.l.b16 %v507
    %v1915 = vunpack.c.h.b16 %v507
    %v1916 = vunpack.c.l.b16 %v508
    %v1917 = vunpack.c.h.b16 %v508
    %v1918 = vunpack.c.l.b16 %v509
    %v1919 = vunpack.c.h.b16 %v509
    %v1920 = vpack.c.b16 %v1412, %v1408
    %v1921 = vpack.c.b16 %v1413, %v1409
    %v1922 = vpack.c.b16 %v1414, %v1410
    %v1923 = vpack.c.b16 %v1415, %v1411
    %v1924 = vpack.c.b16 %v1420, %v1416
    %v1925 = vpack.c.b16 %v1421, %v1417
    %v1926 = vpack.c.b16 %v1422, %v1418
    %v1927 = vpack.c.b16 %v1423, %v1419
    %v1928 = vpack.c.b16 %v1428, %v1424
    %v1929 = vpack.c.b16 %v1429, %v1425
    %v1930 = vpack.c.b16 %v1430, %v1426
    %v1931 = vpack.c.b16 %v1431, %v1427
    %v1932 = vpack.c.b16 %v1436, %v1432
    %v1933 = vpack.c.b16 %v1437, %v1433
    %v1934 = vpack.c.b16 %v1438, %v1434
    %v1935 = vpack.c.b16 %v1439, %v1435
    %v1936 = vpack.c.b16 %v1444, %v1440
    %v1937 = vpack.c.b16 %v1445, %v1441
    %v1938 = vpack.c.b16 %v1446, %v1442
    %v1939 = vpack.c.b16 %v1447, %v1443
    %v1940 = vpack.c.b16 %v1452, %v1448
    %v1941 = vpack.c.b16 %v1453, %v1449
    %v1942 = vpack.c.b16 %v1454, %v1450
    %v1943 = vpack.c.b16 %v1455, %v1451
    %v1944 = vpack.c.b16 %v1460, %v1456
    %v1945 = vpack.c.b16 %v1461, %v1457
    %v1946 = vpack.c.b16 %v1462, %v1458
    %v1947 = vpack.c.b16 %v1463, %v1459
    %v1948 = vpack.c.b16 %v1468, %v1464
    %v1949 = vpack.c.b16 %v1469, %v1465
    %v1950 = vpack.c.b16 %v1470, %v1466
    %v1951 = vpack.c.b16 %v1471, %v1467
    %v1952 = vpack.c.b16 %v1476, %v1472
    %v1953 = vpack.c.b16 %v1477, %v1473
    %v1954 = vpack.c.b16 %v1478, %v1474
    %v1955 = vpack.c.b16 %v1479, %v1475
    %v1956 = vpack.c.b16 %v1484, %v1480
    %v1957 = vpack.c.b16 %v1485, %v1481
    %v1958 = vpack.c.b16 %v1486, %v1482
    %v1959 = vpack.c.b16 %v1487, %v1483
    %v1960 = vpack.c.b16 %v1492, %v1488
    %v1961 = vpack.c.b16 %v1493, %v1489
    %v1962 = vpack.c.b16 %v1494, %v1490
    %v1963 = vpack.c.b16 %v1495, %v1491
    %v1964 = vpack.c.b16 %v1500, %v1496
    %v1965 = vpack.c.b16 %v1501, %v1497
    %v1966 = vpack.c.b16 %v1502, %v1498
    %v1967 = vpack.c.b16 %v1503, %v1499
    %v1968 = vpack.c.b16 %v1508, %v1504
    %v1969 = vpack.c.b16 %v1509, %v1505
    %v1970 = vpack.c.b16 %v1510, %v1506
    %v1971 = vpack.c.b16 %v1511, %v1507
    %v1972 = vpack.c.b16 %v1516, %v1512
    %v1973 = vpack.c.b16 %v1517, %v1513
    %v1974 = vpack.c.b16 %v1518, %v1514
    %v1975 = vpack.c.b16 %v1519, %v1515
    %v1976 = vpack.c.b16 %v1524, %v1520
    %v1977 = vpack.c.b16 %v1525, %v1521
    %v1978 = vpack.c.b16 %v1526, %v1522
    %v1979 = vpack.c.b16 %v1527, %v1523
    %v1980 = vpack.c.b16 %v1532, %v1528
    %v1981 = vpack.c.b16 %v1533, %v1529
    %v1982 = vpack.c.b16 %v1534, %v1530
    %v1983 = vpack.c.b16 %v1535, %v1531
    %v1984 = vpack.c.b16 %v1540, %v1536
    %v1985 = vpack.c.b16 %v1541, %v1537
    %v1986 = vpack.c.b16 %v1542, %v1538
    %v1987 = vpack.c.b16 %v1543, %v1539
    %v1988 = vpack.c.b16 %v1548, %v1544
    %v1989 = vpack.c.b16 %v1549, %v1545
    %v1990 = vpack.c.b16 %v1550, %v1546
    %v1991 = vpack.c.b16 %v1551, %v1547
    %v1992 = vpack.c.b16 %v1556, %v1552
    %v1993 = vpack.c.b16 %v1557, %v1553
    %v1994 = vpack.c.b16 %v1558, %v1554
    %v1995 = vpack.c.b16 %v1559, %v1555
    %v1996 = vpack.c.b16 %v1564, %v1560
    %v1997 = vpack.c.b16 %v1565, %v1561
    %v1998 = vpack.c.b16 %v1566, %v1562
    %v1999 = vpack.c.b16 %v1567, %v1563
    %v2000 = vpack.c.b16 %v1572, %v1568
    %v2001 = vpack.c.b16 %v1573, %v1569
    %v2002 = vpack.c.b16 %v1574, %v1570
    %v2003 = vpack.c.b16 %v1575, %v1571
    %v2004 = vpack.c.b16 %v1580, %v1576
    %v2005 = vpack.c.b16 %v1581, %v1577
    %v2006 = vpack.c.b16 %v1582, %v1578
    %v2007 = vpack.c.b16 %v1583, %v1579
    %v2008 = vpack.c.b16 %v1588, %v1584
    %v2009 = vpack.c.b16 %v1589, %v1585
    %v2010 = vpack.c.b16 %v1590, %v1586
    %v2011 = vpack.c.b16 %v1591, %v1587
    %v2012 = vpack.c.b16 %v1596, %v1592
    %v2013 = vpack.c.b16 %v1597, %v1593
    %v2014 = vpack.c.b16 %v1598, %v1594
    %v2015 = vpack.c.b16 %v1599, %v1595
    %v2016 = vpack.c.b16 %v1604, %v1600
    %v2017 = vpack.c.b16 %v1605, %v1601
    %v2018 = vpack.c.b16 %v1606, %v1602
    %v2019 = vpack.c.b16 %v1607, %v1603
    %v2020 = vpack.c.b16 %v1612, %v1608
    %v2021 = vpack.c.b16 %v1613, %v1609
    %v2022 = vpack.c.b16 %v1614, %v1610
    %v2023 = vpack.c.b16 %v1615, %v1611
    %v2024 = vpack.c.b16 %v1620, %v1616
    %v2025 = vpack.c.b16 %v1621, %v1617
    %v2026 = vpack.c.b16 %v1622, %v1618
    %v2027 = vpack.c.b16 %v1623, %v1619
    %v2028 = vpack.c.b16 %v1628, %v1624
    %v2029 = vpack.c.b16 %v1629, %v1625
    %v2030 = vpack.c.b16 %v1630, %v1626
    %v2031 = vpack.c.b16 %v1631, %v1627
    %v2032 = vpack.c.b16 %v1636, %v1632
    %v2033 = vpack.c.b16 %v1637, %v1633
    %v2034 = vpack.c.b16 %v1638, %v1634
    %v2035 = vpack.c.b16 %v1639, %v1635
    %v2036 = vpack.c.b16 %v1644, %v1640
    %v2037 = vpack.c.b16 %v1645, %v1641
    %v2038 = vpack.c.b16 %v1646, %v1642
    %v2039 = vpack.c.b16 %v1647, %v1643
    %v2040 = vpack.c.b16 %v1652, %v1648
    %v2041 = vpack.c.b16 %v1653, %v1649
    %v2042 = vpack.c.b16 %v1654, %v1650
    %v2043 = vpack.c.b16 %v1655, %v1651
    %v2044 = vpack.c.b16 %v1660, %v1656
    %v2045 = vpack.c.b16 %v1661, %v1657
    %v2046 = vpack.c.b16 %v1662, %v1658
    %v2047 = vpack.c.b16 %v1663, %v1659
    %v2048 = vpack.c.b16 %v1668, %v1664
    %v2049 = vpack.c.b16 %v1669, %v1665
    %v2050 = vpack.c.b16 %v1670, %v1666
    %v2051 = vpack.c.b16 %v1671, %v1667
    %v2052 = vpack.c.b16 %v1676, %v1672
    %v2053 = vpack.c.b16 %v1677, %v1673
    %v2054 = vpack.c.b16 %v1678, %v1674
    %v2055 = vpack.c.b16 %v1679, %v1675
    %v2056 = vpack.c.b16 %v1684, %v1680
    %v2057 = vpack.c.b16 %v1685, %v1681
    %v2058 = vpack.c.b16 %v1686, %v1682
    %v2059 = vpack.c.b16 %v1687, %v1683
    %v2060 = vpack.c.b16 %v1692, %v1688
    %v2061 = vpack.c.b16 %v1693, %v1689
    %v2062 = vpack.c.b16 %v1694, %v1690
    %v2063 = vpack.c.b16 %v1695, %v1691
    %v2064 = vpack.c.b16 %v1700, %v1696
    %v2065 = vpack.c.b16 %v1701, %v1697
    %v2066 = vpack.c.b16 %v1702, %v1698
    %v2067 = vpack.c.b16 %v1703, %v1699
    %v2068 = vpack.c.b16 %v1708, %v1704
    %v2069 = vpack.c.b16 %v1709, %v1705
    %v2070 = vpack.c.b16 %v1710, %v1706
    %v2071 = vpack.c.b16 %v1711, %v1707
    %v2072 = vpack.c.b16 %v1716, %v1712
    %v2073 = vpack.c.b16 %v1717, %v1713
    %v2074 = vpack.c.b16 %v1718, %v1714
    %v2075 = vpack.c.b16 %v1719, %v1715
    %v2076 = vpack.c.b16 %v1724, %v1720
    %v2077 = vpack.c.b16 %v1725, %v1721
    %v2078 = vpack.c.b16 %v1726, %v1722
    %v2079 = vpack.c.b16 %v1727, %v1723
    %v2080 = vpack.c.b16 %v1732, %v1728
    %v2081 = vpack.c.b16 %v1733, %v1729
    %v2082 = vpack.c.b16 %v1734, %v1730
    %v2083 = vpack.c.b16 %v1735, %v1731
    %v2084 = vpack.c.b16 %v1740, %v1736
    %v2085 = vpack.c.b16 %v1741, %v1737
    %v2086 = vpack.c.b16 %v1742, %v1738
    %v2087 = vpack.c.b16 %v1743, %v1739
    %v2088 = vpack.c.b16 %v1748, %v1744
    %v2089 = vpack.c.b16 %v1749, %v1745
    %v2090 = vpack.c.b16 %v1750, %v1746
    %v2091 = vpack.c.b16 %v1751, %v1747
    %v2092 = vpack.c.b16 %v1756, %v1752
    %v2093 = vpack.c.b16 %v1757, %v1753
    %v2094 = vpack.c.b16 %v1758, %v1754
    %v2095 = vpack.c.b16 %v1759, %v1755
    %v2096 = vpack.c.b16 %v1764, %v1760
    %v2097 = vpack.c.b16 %v1765, %v1761
    %v2098 = vpack.c.b16 %v1766, %v1762
    %v2099 = vpack.c.b16 %v1767, %v1763
    %v2100 = vpack.c.b16 %v1772, %v1768
    %v2101 = vpack.c.b16 %v1773, %v1769
    %v2102 = vpack.c.b16 %v1774, %v1770
    %v2103 = vpack.c.b16 %v1775, %v1771
    %v2104 = vpack.c.b16 %v1780, %v1776
    %v2105 = vpack.c.b16 %v1781, %v1777
    %v2106 = vpack.c.b16 %v1782, %v1778
    %v2107 = vpack.c.b16 %v1783, %v1779
    %v2108 = vpack.c.b16 %v1788, %v1784
    %v2109 = vpack.c.b16 %v1789, %v1785
    %v2110 = vpack.c.b16 %v1790, %v1786
    %v2111 = vpack.c.b16 %v1791, %v1787
    %v2112 = vpack.c.b16 %v1796, %v1792
    %v2113 = vpack.c.b16 %v1797, %v1793
    %v2114 = vpack.c.b16 %v1798, %v1794
    %v2115 = vpack.c.b16 %v1799, %v1795
    %v2116 = vpack.c.b16 %v1804, %v1800
    %v2117 = vpack.c.b16 %v1805, %v1801
    %v2118 = vpack.c.b16 %v1806, %v1802
    %v2119 = vpack.c.b16 %v1807, %v1803
    %v2120 = vpack.c.b16 %v1812, %v1808
    %v2121 = vpack.c.b16 %v1813, %v1809
    %v2122 = vpack.c.b16 %v1814, %v1810
    %v2123 = vpack.c.b16 %v1815, %v1811
    %v2124 = vpack.c.b16 %v1820, %v1816
    %v2125 = vpack.c.b16 %v1821, %v1817
    %v2126 = vpack.c.b16 %v1822, %v1818
    %v2127 = vpack.c.b16 %v1823, %v1819
    %v2128 = vpack.c.b16 %v1828, %v1824
    %v2129 = vpack.c.b16 %v1829, %v1825
    %v2130 = vpack.c.b16 %v1830, %v1826
    %v2131 = vpack.c.b16 %v1831, %v1827
    %v2132 = vpack.c.b16 %v1836, %v1832
    %v2133 = vpack.c.b16 %v1837, %v1833
    %v2134 = vpack.c.b16 %v1838, %v1834
    %v2135 = vpack.c.b16 %v1839, %v1835
    %v2136 = vpack.c.b16 %v1844, %v1840
    %v2137 = vpack.c.b16 %v1845, %v1841
    %v2138 = vpack.c.b16 %v1846, %v1842
    %v2139 = vpack.c.b16 %v1847, %v1843
    %v2140 = vpack.c.b16 %v1852, %v1848
    %v2141 = vpack.c.b16 %v1853, %v1849
    %v2142 = vpack.c.b16 %v1854, %v1850
    %v2143 = vpack.c.b16 %v1855, %v1851
    %v2144 = vpack.c.b16 %v1860, %v1856
    %v2145 = vpack.c.b16 %v1861, %v1857
    %v2146 = vpack.c.b16 %v1862, %v1858
    %v2147 = vpack.c.b16 %v1863, %v1859
    %v2148 = vpack.c.b16 %v1868, %v1864
    %v2149 = vpack.c.b16 %v1869, %v1865
    %v2150 = vpack.c.b16 %v1870, %v1866
    %v2151 = vpack.c.b16 %v1871, %v1867
    %v2152 = vpack.c.b16 %v1876, %v1872
    %v2153 = vpack.c.b16 %v1877, %v1873
    %v2154 = vpack.c.b16 %v1878, %v1874
    %v2155 = vpack.c.b16 %v1879, %v1875
    %v2156 = vpack.c.b16 %v1884, %v1880
    %v2157 = vpack.c.b16 %v1885, %v1881
    %v2158 = vpack.c.b16 %v1886, %v1882
    %v2159 = vpack.c.b16 %v1887, %v1883
    %v2160 = vpack.c.b16 %v1892, %v1888
    %v2161 = vpack.c.b16 %v1893, %v1889
    %v2162 = vpack.c.b16 %v1894, %v1890
    %v2163 = vpack.c.b16 %v1895, %v1891
    %v2164 = vpack.c.b16 %v1900, %v1896
    %v2165 = vpack.c.b16 %v1901, %v1897
    %v2166 = vpack.c.b16 %v1902, %v1898
    %v2167 = vpack.c.b16 %v1903, %v1899
    %v2168 = vpack.c.b16 %v1908, %v1904
    %v2169 = vpack.c.b16 %v1909, %v1905
    %v2170 = vpack.c.b16 %v1910, %v1906
    %v2171 = vpack.c.b16 %v1911, %v1907
    %v2172 = vpack.c.b16 %v1916, %v1912
    %v2173 = vpack.c.b16 %v1917, %v1913
    %v2174 = vpack.c.b16 %v1918, %v1914
    %v2175 = vpack.c.b16 %v1919, %v1915
    %2432 = vmatprep.subr.bf16.mxu0 %v1949
    %2433 = vmatpush1.bf16.msra.mxu0 %v1948
    %2434 = vmatprep.subr.bf16.mxu0 %v1945
    %2435 = vmatpush1.bf16.msra.mxu0 %v1944
    %2436 = vmatprep.subr.bf16.mxu0 %v1941
    %2437 = vmatpush1.bf16.msra.mxu0 %v1940
    %2438 = vmatprep.subr.bf16.mxu0 %v1937
    %2439 = vmatpush1.bf16.msra.mxu0 %v1936
    %2440 = vmatprep.subr.bf16.mxu0 %v1933
    %2441 = vmatpush1.bf16.msra.mxu0 %v1932
    %2442 = vmatprep.subr.bf16.mxu0 %v1929
    %2443 = vmatpush1.bf16.msra.mxu0 %v1928
    %2444 = vmatprep.subr.bf16.mxu0 %v1925
    %2445 = vmatpush1.bf16.msra.mxu0 %v1924
    %2446 = vmatprep.subr.bf16.mxu0 %v1921
    %2447 = vmatpush1.bf16.msra.mxu0 %v1920
    %2448 = vmatprep.subr.bf16.mxu0 %v1981
    %2449 = vmatpush2.bf16.msra.mxu0 %v1980
    %2450 = vmatprep.subr.bf16.mxu0 %v1977
    %2451 = vmatpush2.bf16.msra.mxu0 %v1976
    %2452 = vmatprep.subr.bf16.mxu0 %v1973
    %2453 = vmatpush2.bf16.msra.mxu0 %v1972
    %2454 = vmatprep.subr.bf16.mxu0 %v1969
    %2455 = vmatpush2.bf16.msra.mxu0 %v1968
    %2456 = vmatprep.subr.bf16.mxu0 %v1965
    %2457 = vmatpush2.bf16.msra.mxu0 %v1964
    %2458 = vmatprep.subr.bf16.mxu0 %v1961
    %2459 = vmatpush2.bf16.msra.mxu0 %v1960
    %2460 = vmatprep.subr.bf16.mxu0 %v1957
    %2461 = vmatpush2.bf16.msra.mxu0 %v1956
    %2462 = vmatprep.subr.bf16.mxu0 %v1953
    %2463 = vmatpush2.bf16.msra.mxu0 %v1952
    %2464 = vmatprep.mubr.bf16.mxu0 %v1137
    %2465 = vmatmul.mubr.bf16.gmra.mxu0 %v1136
    %v2466 = vpop.f32.mrf.mxu0
    %v2467 = vadd.f32 0.0, %v2466
    %v2468 = vpop.f32.mrf.mxu0
    %v2469 = vadd.f32 0.0, %v2468
    %v2470 = vpop.f32.mrf.mxu0
    %v2471 = vadd.f32 0.0, %v2470
    %v2472 = vpop.f32.mrf.mxu0
    %v2473 = vadd.f32 0.0, %v2472
    %2474 = vdwg.mxu0
    %2475 = vmatprep.subr.bf16.mxu0 %v2013
    %2476 = vmatpush1.bf16.msra.mxu0 %v2012
    %2477 = vmatprep.subr.bf16.mxu0 %v2009
    %2478 = vmatpush1.bf16.msra.mxu0 %v2008
    %2479 = vmatprep.subr.bf16.mxu0 %v2005
    %2480 = vmatpush1.bf16.msra.mxu0 %v2004
    %2481 = vmatprep.subr.bf16.mxu0 %v2001
    %2482 = vmatpush1.bf16.msra.mxu0 %v2000
    %2483 = vmatprep.subr.bf16.mxu0 %v1997
    %2484 = vmatpush1.bf16.msra.mxu0 %v1996
    %2485 = vmatprep.subr.bf16.mxu0 %v1993
    %2486 = vmatpush1.bf16.msra.mxu0 %v1992
    %2487 = vmatprep.subr.bf16.mxu0 %v1989
    %2488 = vmatpush1.bf16.msra.mxu0 %v1988
    %2489 = vmatprep.subr.bf16.mxu0 %v1985
    %2490 = vmatpush1.bf16.msra.mxu0 %v1984
    %2491 = vmatprep.subr.bf16.mxu0 %v2045
    %2492 = vmatpush2.bf16.msra.mxu0 %v2044
    %2493 = vmatprep.subr.bf16.mxu0 %v2041
    %2494 = vmatpush2.bf16.msra.mxu0 %v2040
    %2495 = vmatprep.subr.bf16.mxu0 %v2037
    %2496 = vmatpush2.bf16.msra.mxu0 %v2036
    %2497 = vmatprep.subr.bf16.mxu0 %v2033
    %2498 = vmatpush2.bf16.msra.mxu0 %v2032
    %2499 = vmatprep.subr.bf16.mxu0 %v2029
    %2500 = vmatpush2.bf16.msra.mxu0 %v2028
    %2501 = vmatprep.subr.bf16.mxu0 %v2025
    %2502 = vmatpush2.bf16.msra.mxu0 %v2024
    %2503 = vmatprep.subr.bf16.mxu0 %v2021
    %2504 = vmatpush2.bf16.msra.mxu0 %v2020
    %2505 = vmatprep.subr.bf16.mxu0 %v2017
    %2506 = vmatpush2.bf16.msra.mxu0 %v2016
    %2507 = vmatprep.mubr.bf16.mxu0 %v1139
    %2508 = vmatmul.mubr.bf16.gmra.mxu0 %v1138
    %v2509 = vpop.f32.mrf.mxu0
    %v2510 = vadd.f32 %v2467, %v2509
    %v2511 = vpop.f32.mrf.mxu0
    %v2512 = vadd.f32 %v2469, %v2511
    %v2513 = vpop.f32.mrf.mxu0
    %v2514 = vadd.f32 %v2471, %v2513
    %v2515 = vpop.f32.mrf.mxu0
    %v2516 = vadd.f32 %v2473, %v2515
    %2517 = vdwg.mxu0
    %2518 = vmatprep.subr.bf16.mxu0 %v2077
    %2519 = vmatpush1.bf16.msra.mxu0 %v2076
    %2520 = vmatprep.subr.bf16.mxu0 %v2073
    %2521 = vmatpush1.bf16.msra.mxu0 %v2072
    %2522 = vmatprep.subr.bf16.mxu0 %v2069
    %2523 = vmatpush1.bf16.msra.mxu0 %v2068
    %2524 = vmatprep.subr.bf16.mxu0 %v2065
    %2525 = vmatpush1.bf16.msra.mxu0 %v2064
    %2526 = vmatprep.subr.bf16.mxu0 %v2061
    %2527 = vmatpush1.bf16.msra.mxu0 %v2060
    %2528 = vmatprep.subr.bf16.mxu0 %v2057
    %2529 = vmatpush1.bf16.msra.mxu0 %v2056
    %2530 = vmatprep.subr.bf16.mxu0 %v2053
    %2531 = vmatpush1.bf16.msra.mxu0 %v2052
    %2532 = vmatprep.subr.bf16.mxu0 %v2049
    %2533 = vmatpush1.bf16.msra.mxu0 %v2048
    %2534 = vmatprep.subr.bf16.mxu0 %v2109
    %2535 = vmatpush2.bf16.msra.mxu0 %v2108
    %2536 = vmatprep.subr.bf16.mxu0 %v2105
    %2537 = vmatpush2.bf16.msra.mxu0 %v2104
    %2538 = vmatprep.subr.bf16.mxu0 %v2101
    %2539 = vmatpush2.bf16.msra.mxu0 %v2100
    %2540 = vmatprep.subr.bf16.mxu0 %v2097
    %2541 = vmatpush2.bf16.msra.mxu0 %v2096
    %2542 = vmatprep.subr.bf16.mxu0 %v2093
    %2543 = vmatpush2.bf16.msra.mxu0 %v2092
    %2544 = vmatprep.subr.bf16.mxu0 %v2089
    %2545 = vmatpush2.bf16.msra.mxu0 %v2088
    %2546 = vmatprep.subr.bf16.mxu0 %v2085
    %2547 = vmatpush2.bf16.msra.mxu0 %v2084
    %2548 = vmatprep.subr.bf16.mxu0 %v2081
    %2549 = vmatpush2.bf16.msra.mxu0 %v2080
    %2550 = vmatprep.mubr.bf16.mxu0 %v1141
    %2551 = vmatmul.mubr.bf16.gmra.mxu0 %v1140
    %v2552 = vpop.f32.mrf.mxu0
    %v2553 = vadd.f32 %v2510, %v2552
    %v2554 = vpop.f32.mrf.mxu0
    %v2555 = vadd.f32 %v2512, %v2554
    %v2556 = vpop.f32.mrf.mxu0
    %v2557 = vadd.f32 %v2514, %v2556
    %v2558 = vpop.f32.mrf.mxu0
    %v2559 = vadd.f32 %v2516, %v2558
    %2560 = vdwg.mxu0
    %2561 = vmatprep.subr.bf16.mxu0 %v2141
    %2562 = vmatpush1.bf16.msra.mxu0 %v2140
    %2563 = vmatprep.subr.bf16.mxu0 %v2137
    %2564 = vmatpush1.bf16.msra.mxu0 %v2136
    %2565 = vmatprep.subr.bf16.mxu0 %v2133
    %2566 = vmatpush1.bf16.msra.mxu0 %v2132
    %2567 = vmatprep.subr.bf16.mxu0 %v2129
    %2568 = vmatpush1.bf16.msra.mxu0 %v2128
    %2569 = vmatprep.subr.bf16.mxu0 %v2125
    %2570 = vmatpush1.bf16.msra.mxu0 %v2124
    %2571 = vmatprep.subr.bf16.mxu0 %v2121
    %2572 = vmatpush1.bf16.msra.mxu0 %v2120
    %2573 = vmatprep.subr.bf16.mxu0 %v2117
    %2574 = vmatpush1.bf16.msra.mxu0 %v2116
    %2575 = vmatprep.subr.bf16.mxu0 %v2113
    %2576 = vmatpush1.bf16.msra.mxu0 %v2112
    %2577 = vmatprep.subr.bf16.mxu0 %v2173
    %2578 = vmatpush2.bf16.msra.mxu0 %v2172
    %2579 = vmatprep.subr.bf16.mxu0 %v2169
    %2580 = vmatpush2.bf16.msra.mxu0 %v2168
    %2581 = vmatprep.subr.bf16.mxu0 %v2165
    %2582 = vmatpush2.bf16.msra.mxu0 %v2164
    %2583 = vmatprep.subr.bf16.mxu0 %v2161
    %2584 = vmatpush2.bf16.msra.mxu0 %v2160
    %2585 = vmatprep.subr.bf16.mxu0 %v2157
    %2586 = vmatpush2.bf16.msra.mxu0 %v2156
    %2587 = vmatprep.subr.bf16.mxu0 %v2153
    %2588 = vmatpush2.bf16.msra.mxu0 %v2152
    %2589 = vmatprep.subr.bf16.mxu0 %v2149
    %2590 = vmatpush2.bf16.msra.mxu0 %v2148
    %2591 = vmatprep.subr.bf16.mxu0 %v2145
    %2592 = vmatpush2.bf16.msra.mxu0 %v2144
    %2593 = vmatprep.mubr.bf16.mxu0 %v1143
    %2594 = vmatmul.mubr.bf16.gmra.mxu0 %v1142
    %v2595 = vpop.f32.mrf.mxu0
    %v2596 = vadd.f32 %v2553, %v2595
    %v2597 = vpop.f32.mrf.mxu0
    %v2598 = vadd.f32 %v2555, %v2597
    %v2599 = vpop.f32.mrf.mxu0
    %v2600 = vadd.f32 %v2557, %v2599
    %v2601 = vpop.f32.mrf.mxu0
    %v2602 = vadd.f32 %v2559, %v2601
    %2603 = vdwg.mxu0
    %2604 = vmatprep.subr.bf16.mxu0 %v1951
    %2605 = vmatpush1.bf16.msra.mxu0 %v1950
    %2606 = vmatprep.subr.bf16.mxu0 %v1947
    %2607 = vmatpush1.bf16.msra.mxu0 %v1946
    %2608 = vmatprep.subr.bf16.mxu0 %v1943
    %2609 = vmatpush1.bf16.msra.mxu0 %v1942
    %2610 = vmatprep.subr.bf16.mxu0 %v1939
    %2611 = vmatpush1.bf16.msra.mxu0 %v1938
    %2612 = vmatprep.subr.bf16.mxu0 %v1935
    %2613 = vmatpush1.bf16.msra.mxu0 %v1934
    %2614 = vmatprep.subr.bf16.mxu0 %v1931
    %2615 = vmatpush1.bf16.msra.mxu0 %v1930
    %2616 = vmatprep.subr.bf16.mxu0 %v1927
    %2617 = vmatpush1.bf16.msra.mxu0 %v1926
    %2618 = vmatprep.subr.bf16.mxu0 %v1923
    %2619 = vmatpush1.bf16.msra.mxu0 %v1922
    %2620 = vmatprep.subr.bf16.mxu0 %v1983
    %2621 = vmatpush2.bf16.msra.mxu0 %v1982
    %2622 = vmatprep.subr.bf16.mxu0 %v1979
    %2623 = vmatpush2.bf16.msra.mxu0 %v1978
    %2624 = vmatprep.subr.bf16.mxu0 %v1975
    %2625 = vmatpush2.bf16.msra.mxu0 %v1974
    %2626 = vmatprep.subr.bf16.mxu0 %v1971
    %2627 = vmatpush2.bf16.msra.mxu0 %v1970
    %2628 = vmatprep.subr.bf16.mxu0 %v1967
    %2629 = vmatpush2.bf16.msra.mxu0 %v1966
    %2630 = vmatprep.subr.bf16.mxu0 %v1963
    %2631 = vmatpush2.bf16.msra.mxu0 %v1962
    %2632 = vmatprep.subr.bf16.mxu0 %v1959
    %2633 = vmatpush2.bf16.msra.mxu0 %v1958
    %2634 = vmatprep.subr.bf16.mxu0 %v1955
    %2635 = vmatpush2.bf16.msra.mxu0 %v1954
    %2636 = vmatprep.mubr.bf16.mxu0 %v1137
    %2637 = vmatmul.mubr.bf16.gmra.mxu0 %v1136
    %v2638 = vpop.f32.mrf.mxu0
    %v2639 = vadd.f32 0.0, %v2638
    %v2640 = vpop.f32.mrf.mxu0
    %v2641 = vadd.f32 0.0, %v2640
    %v2642 = vpop.f32.mrf.mxu0
    %v2643 = vadd.f32 0.0, %v2642
    %v2644 = vpop.f32.mrf.mxu0
    %v2645 = vadd.f32 0.0, %v2644
    %2646 = vdwg.mxu0
    %2647 = vmatprep.subr.bf16.mxu0 %v2015
    %2648 = vmatpush1.bf16.msra.mxu0 %v2014
    %2649 = vmatprep.subr.bf16.mxu0 %v2011
    %2650 = vmatpush1.bf16.msra.mxu0 %v2010
    %2651 = vmatprep.subr.bf16.mxu0 %v2007
    %2652 = vmatpush1.bf16.msra.mxu0 %v2006
    %2653 = vmatprep.subr.bf16.mxu0 %v2003
    %2654 = vmatpush1.bf16.msra.mxu0 %v2002
    %2655 = vmatprep.subr.bf16.mxu0 %v1999
    %2656 = vmatpush1.bf16.msra.mxu0 %v1998
    %2657 = vmatprep.subr.bf16.mxu0 %v1995
    %2658 = vmatpush1.bf16.msra.mxu0 %v1994
    %2659 = vmatprep.subr.bf16.mxu0 %v1991
    %2660 = vmatpush1.bf16.msra.mxu0 %v1990
    %2661 = vmatprep.subr.bf16.mxu0 %v1987
    %2662 = vmatpush1.bf16.msra.mxu0 %v1986
    %2663 = vmatprep.subr.bf16.mxu0 %v2047
    %2664 = vmatpush2.bf16.msra.mxu0 %v2046
    %2665 = vmatprep.subr.bf16.mxu0 %v2043
    %2666 = vmatpush2.bf16.msra.mxu0 %v2042
    %2667 = vmatprep.subr.bf16.mxu0 %v2039
    %2668 = vmatpush2.bf16.msra.mxu0 %v2038
    %2669 = vmatprep.subr.bf16.mxu0 %v2035
    %2670 = vmatpush2.bf16.msra.mxu0 %v2034
    %2671 = vmatprep.subr.bf16.mxu0 %v2031
    %2672 = vmatpush2.bf16.msra.mxu0 %v2030
    %2673 = vmatprep.subr.bf16.mxu0 %v2027
    %2674 = vmatpush2.bf16.msra.mxu0 %v2026
    %2675 = vmatprep.subr.bf16.mxu0 %v2023
    %2676 = vmatpush2.bf16.msra.mxu0 %v2022
    %2677 = vmatprep.subr.bf16.mxu0 %v2019
    %2678 = vmatpush2.bf16.msra.mxu0 %v2018
    %2679 = vmatprep.mubr.bf16.mxu0 %v1139
    %2680 = vmatmul.mubr.bf16.gmra.mxu0 %v1138
    %v2681 = vpop.f32.mrf.mxu0
    %v2682 = vadd.f32 %v2639, %v2681
    %v2683 = vpop.f32.mrf.mxu0
    %v2684 = vadd.f32 %v2641, %v2683
    %v2685 = vpop.f32.mrf.mxu0
    %v2686 = vadd.f32 %v2643, %v2685
    %v2687 = vpop.f32.mrf.mxu0
    %v2688 = vadd.f32 %v2645, %v2687
    %2689 = vdwg.mxu0
    %2690 = vmatprep.subr.bf16.mxu0 %v2079
    %2691 = vmatpush1.bf16.msra.mxu0 %v2078
    %2692 = vmatprep.subr.bf16.mxu0 %v2075
    %2693 = vmatpush1.bf16.msra.mxu0 %v2074
    %2694 = vmatprep.subr.bf16.mxu0 %v2071
    %2695 = vmatpush1.bf16.msra.mxu0 %v2070
    %2696 = vmatprep.subr.bf16.mxu0 %v2067
    %2697 = vmatpush1.bf16.msra.mxu0 %v2066
    %2698 = vmatprep.subr.bf16.mxu0 %v2063
    %2699 = vmatpush1.bf16.msra.mxu0 %v2062
    %2700 = vmatprep.subr.bf16.mxu0 %v2059
    %2701 = vmatpush1.bf16.msra.mxu0 %v2058
    %2702 = vmatprep.subr.bf16.mxu0 %v2055
    %2703 = vmatpush1.bf16.msra.mxu0 %v2054
    %2704 = vmatprep.subr.bf16.mxu0 %v2051
    %2705 = vmatpush1.bf16.msra.mxu0 %v2050
    %2706 = vmatprep.subr.bf16.mxu0 %v2111
    %2707 = vmatpush2.bf16.msra.mxu0 %v2110
    %2708 = vmatprep.subr.bf16.mxu0 %v2107
    %2709 = vmatpush2.bf16.msra.mxu0 %v2106
    %2710 = vmatprep.subr.bf16.mxu0 %v2103
    %2711 = vmatpush2.bf16.msra.mxu0 %v2102
    %2712 = vmatprep.subr.bf16.mxu0 %v2099
    %2713 = vmatpush2.bf16.msra.mxu0 %v2098
    %2714 = vmatprep.subr.bf16.mxu0 %v2095
    %2715 = vmatpush2.bf16.msra.mxu0 %v2094
    %2716 = vmatprep.subr.bf16.mxu0 %v2091
    %2717 = vmatpush2.bf16.msra.mxu0 %v2090
    %2718 = vmatprep.subr.bf16.mxu0 %v2087
    %2719 = vmatpush2.bf16.msra.mxu0 %v2086
    %2720 = vmatprep.subr.bf16.mxu0 %v2083
    %2721 = vmatpush2.bf16.msra.mxu0 %v2082
    %2722 = vmatprep.mubr.bf16.mxu0 %v1141
    %2723 = vmatmul.mubr.bf16.gmra.mxu0 %v1140
    %v2724 = vpop.f32.mrf.mxu0
    %v2725 = vadd.f32 %v2682, %v2724
    %v2726 = vpop.f32.mrf.mxu0
    %v2727 = vadd.f32 %v2684, %v2726
    %v2728 = vpop.f32.mrf.mxu0
    %v2729 = vadd.f32 %v2686, %v2728
    %v2730 = vpop.f32.mrf.mxu0
    %v2731 = vadd.f32 %v2688, %v2730
    %2732 = vdwg.mxu0
    %2733 = vmatprep.subr.bf16.mxu0 %v2143
    %2734 = vmatpush1.bf16.msra.mxu0 %v2142
    %2735 = vmatprep.subr.bf16.mxu0 %v2139
    %2736 = vmatpush1.bf16.msra.mxu0 %v2138
    %2737 = vmatprep.subr.bf16.mxu0 %v2135
    %2738 = vmatpush1.bf16.msra.mxu0 %v2134
    %2739 = vmatprep.subr.bf16.mxu0 %v2131
    %2740 = vmatpush1.bf16.msra.mxu0 %v2130
    %2741 = vmatprep.subr.bf16.mxu0 %v2127
    %2742 = vmatpush1.bf16.msra.mxu0 %v2126
    %2743 = vmatprep.subr.bf16.mxu0 %v2123
    %2744 = vmatpush1.bf16.msra.mxu0 %v2122
    %2745 = vmatprep.subr.bf16.mxu0 %v2119
    %2746 = vmatpush1.bf16.msra.mxu0 %v2118
    %2747 = vmatprep.subr.bf16.mxu0 %v2115
    %2748 = vmatpush1.bf16.msra.mxu0 %v2114
    %2749 = vmatprep.subr.bf16.mxu0 %v2175
    %2750 = vmatpush2.bf16.msra.mxu0 %v2174
    %2751 = vmatprep.subr.bf16.mxu0 %v2171
    %2752 = vmatpush2.bf16.msra.mxu0 %v2170
    %2753 = vmatprep.subr.bf16.mxu0 %v2167
    %2754 = vmatpush2.bf16.msra.mxu0 %v2166
    %2755 = vmatprep.subr.bf16.mxu0 %v2163
    %2756 = vmatpush2.bf16.msra.mxu0 %v2162
    %2757 = vmatprep.subr.bf16.mxu0 %v2159
    %2758 = vmatpush2.bf16.msra.mxu0 %v2158
    %2759 = vmatprep.subr.bf16.mxu0 %v2155
    %2760 = vmatpush2.bf16.msra.mxu0 %v2154
    %2761 = vmatprep.subr.bf16.mxu0 %v2151
    %2762 = vmatpush2.bf16.msra.mxu0 %v2150
    %2763 = vmatprep.subr.bf16.mxu0 %v2147
    %2764 = vmatpush2.bf16.msra.mxu0 %v2146
    %2765 = vmatprep.mubr.bf16.mxu0 %v1143
    %2766 = vmatmul.mubr.bf16.gmra.mxu0 %v1142
    %v2767 = vpop.f32.mrf.mxu0
    %v2768 = vadd.f32 %v2725, %v2767
    %v2769 = vpop.f32.mrf.mxu0
    %v2770 = vadd.f32 %v2727, %v2769
    %v2771 = vpop.f32.mrf.mxu0
    %v2772 = vadd.f32 %v2729, %v2771
    %v2773 = vpop.f32.mrf.mxu0
    %v2774 = vadd.f32 %v2731, %v2773
    %2775 = vdwg.mxu0
    %v2776 = vadd.f32 %v1104, %v2596
    %v2777 = vadd.f32 %v1105, %v2598
    %v2778 = vadd.f32 %v1106, %v2768
    %v2779 = vadd.f32 %v1107, %v2770
    %v2780 = vadd.f32 %v1108, %v2600
    %v2781 = vadd.f32 %v1109, %v2602
    %v2782 = vadd.f32 %v1110, %v2772
    %v2783 = vadd.f32 %v1111, %v2774
    %2784 = vst [vmem:[#allocation3] sm:$0xff] %v2776
    %2785 = vst [vmem:[#allocation3 + $0x8] sm:$0xff] %v2777
    %2786 = vst [vmem:[#allocation3 + $0x10] sm:$0xff] %v2778
    %2787 = vst [vmem:[#allocation3 + $0x18] sm:$0xff] %v2779
    %2788 = vst [vmem:[#allocation3 + $0x20] sm:$0xff] %v2780
    %2789 = vst [vmem:[#allocation3 + $0x28] sm:$0xff] %v2781
    %2790 = vst [vmem:[#allocation3 + $0x30] sm:$0xff] %v2782
    %2791 = vst [vmem:[#allocation3 + $0x38] sm:$0xff] %v2783
    // Predicated region
    $region54: #{tpu_custom_call.1} parent=1 // pred_check
      %p2792 = pneg %p88
    $region55: #{tpu_custom_call.1} parent=1 // pred_check_branch
      %2794 = sbr.rel (%p2792) target = $region57
    $region56: #{tpu_custom_call.1} parent=1 // pred_region
      %v2795 = vld [vmem:[#allocation2] sm:$0xff]
      %v2796 = vld [vmem:[#allocation2 + $0x8] sm:$0xff]
      %v2797 = vld [vmem:[%s3] sm:$0x1]
      %v2799 = vlaneseq
      %v2800 = vshrl.u32 %v2799, 7
      %v2801 = vsub.s32 0, %v2800
      %v2802 = vrot.slane %v2797, %v2801
      %v2804 = vadd.f32 %v2795, %v2802
      %v2805 = vadd.f32 %v2796, %v2802
      %v2806 = vld [vmem:[#allocation3] sm:$0xff]
      %v2807 = vld [vmem:[#allocation3 + $0x8] sm:$0xff]
      %v2808 = vld [vmem:[#allocation3 + $0x10] sm:$0xff]
      %v2809 = vld [vmem:[#allocation3 + $0x18] sm:$0xff]
      %v2810 = vld [vmem:[#allocation3 + $0x20] sm:$0xff]
      %v2811 = vld [vmem:[#allocation3 + $0x28] sm:$0xff]
      %v2812 = vld [vmem:[#allocation3 + $0x30] sm:$0xff]
      %v2813 = vld [vmem:[#allocation3 + $0x38] sm:$0xff]
      %v2814 = vld [vmem:[%s5] sm:$0xf]
      %v2816 = vlaneseq
      %v2817 = vshrl.u32 %v2816, 7
      %v2818 = vsub.s32 0, %v2817
      %v2819 = vrot.slane %v2814, %v2818
      %v2820 = vlaneseq
      %v2821 = vshrl.u32 %v2820, 7
      %v2822 = vsub.s32 1, %v2821
      %v2823 = vrot.slane %v2814, %v2822
      %v2824 = vlaneseq
      %v2825 = vshrl.u32 %v2824, 7
      %v2826 = vsub.s32 2, %v2825
      %v2827 = vrot.slane %v2814, %v2826
      %v2828 = vlaneseq
      %v2829 = vshrl.u32 %v2828, 7
      %v2830 = vsub.s32 3, %v2829
      %v2831 = vrot.slane %v2814, %v2830
      %v2836 = vadd.f32 %v2806, %v2819
      %v2837 = vadd.f32 %v2807, %v2823
      %v2838 = vadd.f32 %v2808, %v2827
      %v2839 = vadd.f32 %v2809, %v2831
      %v2840 = vadd.f32 %v2810, %v2819
      %v2841 = vadd.f32 %v2811, %v2823
      %v2842 = vadd.f32 %v2812, %v2827
      %v2843 = vadd.f32 %v2813, %v2831
      %v2844 = vmax.f32 %v2836, 0.0
      %v2845 = vmax.f32 %v2837, 0.0
      %v2846 = vmax.f32 %v2838, 0.0
      %v2847 = vmax.f32 %v2839, 0.0
      %v2848 = vmax.f32 %v2840, 0.0
      %v2849 = vmax.f32 %v2841, 0.0
      %v2850 = vmax.f32 %v2842, 0.0
      %v2851 = vmax.f32 %v2843, 0.0
      %v2852 = vld [vmem:[%s6] sm:$0xf]
      %v2854 = vlaneseq
      %v2855 = vshrl.u32 %v2854, 7
      %v2856 = vsub.s32 0, %v2855
      %v2857 = vrot.slane %v2852, %v2856
      %v2858 = vlaneseq
      %v2859 = vshrl.u32 %v2858, 7
      %v2860 = vsub.s32 1, %v2859
      %v2861 = vrot.slane %v2852, %v2860
      %v2862 = vlaneseq
      %v2863 = vshrl.u32 %v2862, 7
      %v2864 = vsub.s32 2, %v2863
      %v2865 = vrot.slane %v2852, %v2864
      %v2866 = vlaneseq
      %v2867 = vshrl.u32 %v2866, 7
      %v2868 = vsub.s32 3, %v2867
      %v2869 = vrot.slane %v2852, %v2868
      %v2874 = vmul.f32 %v2844, %v2857
      %v2875 = vmul.f32 %v2845, %v2861
      %v2876 = vmul.f32 %v2846, %v2865
      %v2877 = vmul.f32 %v2847, %v2869
      %v2878 = vmul.f32 %v2848, %v2857
      %v2879 = vmul.f32 %v2849, %v2861
      %v2880 = vmul.f32 %v2850, %v2865
      %v2881 = vmul.f32 %v2851, %v2869
      %v2882 = vadd.f32 %v2874, %v2875
      %v2883 = vadd.f32 %v2882, %v2876
      %v2884 = vadd.f32 %v2883, %v2877
      %2885 = vadd.xlane.f32.xlu0 %v2884
      %v2886 = vpop.xlane.xlu0 %2885
      %v2887 = vadd.f32 %v2878, %v2879
      %v2888 = vadd.f32 %v2887, %v2880
      %v2889 = vadd.f32 %v2888, %v2881
      %2890 = vadd.xlane.f32.xlu0 %v2889
      %v2891 = vpop.xlane.xlu0 %2890
      %v2892 = vld [vmem:[#allocation4] sm:$0x1]
      %v2894 = vlaneseq
      %v2895 = vshrl.u32 %v2894, 7
      %v2896 = vsub.s32 0, %v2895
      %v2897 = vrot.slane %v2892, %v2896
      %v2899 = vadd.f32 %v2886, %v2897
      %v2900 = vadd.f32 %v2891, %v2897
      %v2901 = vand.u32 2147483647, %v2899
      %v2902 = vand.u32 2147483647, %v2900
      %v2903 = vsub.f32 0.0, %v2901
      %v2904 = vsub.f32 0.0, %v2902
      %v2905 = vmul.f32 %v2903, 1.442695
      %v2906 = vpow.pop %v2905
      %v2907 = vmul.f32 %v2904, 1.442695
      %v2908 = vpow.pop %v2907
      %v2909 = vadd.f32 %v2906, 1.0
      %v2910 = vlog2.pop %v2909
      %v2911 = vmul.f32 %v2910, 0.6931472
      %v2912 = vmul.f32 -0.5, %v2906
      %v2913 = vadd.f32 %v2912, 1.0
      %v2914 = vmul.f32 %v2913, %v2906
      %v2915 = vand.u32 2147483647, %v2906
      %vm2916 = vcmp.lt.f32.partialorder %v2915, 0.0004427343
      %v2917 = vsel %vm2916, %v2914, %v2911
      %v2918 = vadd.f32 %v2908, 1.0
      %v2919 = vlog2.pop %v2918
      %v2920 = vmul.f32 %v2919, 0.6931472
      %v2921 = vmul.f32 -0.5, %v2908
      %v2922 = vadd.f32 %v2921, 1.0
      %v2923 = vmul.f32 %v2922, %v2908
      %v2924 = vand.u32 2147483647, %v2908
      %vm2925 = vcmp.lt.f32.partialorder %v2924, 0.0004427343
      %v2926 = vsel %vm2925, %v2923, %v2920
      %v2927 = vmax.f32 %v2899, 0.0
      %v2928 = vmax.f32 %v2900, 0.0
      %v2929 = vadd.f32 %v2917, %v2927
      %v2930 = vadd.f32 %v2926, %v2928
      %v2931 = vadd.f32 %v2929, 1.0
      %v2932 = vadd.f32 %v2930, 1.0
      %v2933 = vrcp.pop %v2931
      %v2934 = vmul.f32 1.0, %v2933
      %v2935 = vrcp.pop %v2932
      %v2936 = vmul.f32 1.0, %v2935
      %2938 = vset.pattern.permute.xlu0 0
      %2939 = vperm.xlu0 %2938, %v2934
      %v2940 = vpop.permute.xlu0 %2939
      %2943 = vset.pattern.permute.xlu0 0
      %2944 = vperm.xlu0 %2943, %v2936
      %v2945 = vpop.permute.xlu0 %2944
      %v2947 = vmul.f32 %v2804, %v2940
      %v2948 = vmul.f32 %v2805, %v2945
      %2949 = vst [vmem:[#allocation13] sm:$0xff] %v2947
      %2950 = vst [vmem:[#allocation13 + $0x8] sm:$0xff] %v2948
    $region57: #{tpu_custom_call.1} parent=1 // pred_fallthru
      _
    // Predicated region
    $region58: #{tpu_custom_call.1} parent=1 // pred_check
      _
    $region59: #{tpu_custom_call.1} parent=1 // pred_check_branch
      %2952 = sbr.rel (0) target = $region61
    $region60: #{tpu_custom_call.1} parent=1 // pred_region
      %s2954 = ssub.s32 256, 256
      %2955 = vsyncadd [#allocation7], %s2954
      %s2956 = sshll.u32 [#allocation13], 4
      %s2957 = int_to_ptr.vmem [resolvable:$true] %s2956
      %2962 = dma.vmem_to_hbm [thread:$0]  %s2957, 256, %s8, [#allocation7], 128, 128, 8
    $region61: #{tpu_custom_call.1} parent=1 // pred_fallthru
      _
    // Predicated region
    $region62: #{tpu_custom_call.1} parent=1 // pred_check
      _
    $region63: #{tpu_custom_call.1} parent=1 // pred_check_branch
      %2964 = sbr.rel (0) target = $region65
    $region64: #{tpu_custom_call.1} parent=1 // pred_region
      %2965 = dma.done [#allocation7], 256
    $region65: #{tpu_custom_call.1} parent=1 // pred_fallthru
      _
    %2966 = vsyncpa [#allocation6], 1
    %2967 = vsyncpa [#allocation9], 1
    %2968 = vsyncpa [#allocation12], 1
    %2969 = vsyncpa [#allocation7], 1

</llo_original>
